<compile_context>
chip_gen: v6e
topology: v6e:2x2x1
jax: 0.10.0
libtpu: 0.0.40
codegen_flags: <defaults>
</compile_context>

<pallas_src>
import functools

import jax
import jax.numpy as jnp
from jax import lax
from jax.experimental import pallas as pl
from jax.experimental.pallas import tpu as pltpu


# ---------------------------------------------------------------------------
# Pallas kernel
# ---------------------------------------------------------------------------
def scrb_kernel(x_ref, wm1_ref, wm2x_ref, wm2x1_ref, bf_ref, head_ref, o_ref,
                *, W):
    # x_ref:   (Bn, D, HWp) VMEM block (HWp = H*W padded to a lane multiple).
    # wm*_ref: (27, HWp) collapsed 3x3x3 taps with the spatial boundary mask
    #          folded in; row index = kd*9 + kh*3 + kw.
    # bf_ref:  (2, HWp) per-(h,w) bias fields (first-conv bias pushed through).
    # head_ref:(4,) SMEM = [wc0 + 1 (residual folded), wc1, wc2, bc].
    Bn, D, HWp = x_ref.shape
    f32 = jnp.float32

    x = x_ref[...]                                  # (Bn, D, HWp)
    zrow = jnp.zeros((Bn, 1, HWp), f32)

    def dshift3(a):
        # Zero-padded D shifts (out[d] = a[d-1], a, out[d] = a[d+1]).
        # Kept as concatenate: copies sit on vld/vst slots (slack) instead of
        # adding D-mask multiplies to the saturated VALU slot; also avoids
        # sublane-roll corner cases when D is not a multiple of 8.
        if D == 1:
            return (zrow, a, zrow)
        return (jnp.concatenate([zrow, a[:, :-1, :]], axis=1),
                a,
                jnp.concatenate([a[:, 1:, :], zrow], axis=1))

    def conv_taps(src3, weight_refs, accs):
        # Collapsed 3x3x3 conv, spatial mask pre-folded into the weights.
        # Spatial rolls of the 3 D-shifted volumes run on the XLU and are
        # shared by all accumulators consuming this source; per tap per
        # accumulator the VALU does exactly 3 mul + 3 add.
        accs = list(accs)
        for kh in range(3):
            for kw in range(3):
                tap = kh * 3 + kw
                if kh == 1 and kw == 1:
                    r0, r1, r2 = src3                 # center tap: no shift
                else:
                    shift = (-((kh - 1) * W + (kw - 1))) % HWp
                    r0 = pltpu.roll(src3[0], shift, 2)
                    r1 = pltpu.roll(src3[1], shift, 2)
                    r2 = pltpu.roll(src3[2], shift, 2)
                for i, w_ref in enumerate(weight_refs):
                    t = (r0 * w_ref[tap]
                         + r1 * w_ref[9 + tap]
                         + r2 * w_ref[18 + tap])
                    accs[i] = t if accs[i] is None else accs[i] + t
        return accs

    # ---- p3d1 collapsed (x -> x1) and x's contribution to p3d2 (shared rolls)
    xd = dshift3(x)
    acc1, acc2 = conv_taps(xd, (wm1_ref, wm2x_ref), (None, None))
    x1 = jnp.maximum(acc1 + bf_ref[0], 0.0)

    # ---- x1's contribution to p3d2 ----
    (acc2,) = conv_taps(dshift3(x1), (wm2x1_ref,), (acc2,))
    x2 = jnp.maximum(acc2 + bf_ref[1], 0.0)

    # ---- c1 (1x1x1 over [x, x1, x2]) + bias + residual (folded into head) ----
    o_ref[...] = (head_ref[0] * x + head_ref[1] * x1
                  + head_ref[2] * x2 + head_ref[3])


# ---------------------------------------------------------------------------
# Wrapper: weight collapse, mask folding, lane padding, generation-aware tiling
# ---------------------------------------------------------------------------
def _target_config():
    """Blocking / VMEM policy derived from the chip's VMEM capacity."""
    cap = 128 * 1024 * 1024
    try:
        info = pltpu.get_tpu_info()
        cap = int(getattr(info, "vmem_capacity_bytes", cap) or cap)
    except Exception:
        pass
    if cap <= 64 * 1024 * 1024:
        # v7x-like: 64 MiB VMEM per TensorCore, 2 cores -> want >=4 grid steps
        # (>=2 per core) and a VMEM request well below capacity.
        return dict(step_budget=6 << 20, vmem_cap=48 << 20, min_steps=4)
    # v5e / v6e: 128 MiB VMEM, single TensorCore -> grow blocks, >=2 steps.
    return dict(step_budget=24 << 20, vmem_cap=96 << 20, min_steps=2)


def _pick_block_n(n, vol_bytes, step_budget, min_steps):
    """Largest divisor of n whose ~14 live volumes fit the per-step budget
    while leaving >= min_steps grid steps; fall back to max steps otherwise."""
    cap = max(1, step_budget // max(1, 14 * vol_bytes))
    candidates = [d for d in range(1, n + 1) if n % d == 0 and d <= cap]
    if not candidates:
        return 1
    ok = [d for d in candidates if n // d >= min_steps]
    return max(ok) if ok else min(candidates)


def scrb_forward(x, w1_5d, b1, w2_5d, b2, w3_5d, b3, w4_5d, b4, wc_5d, bc,
                 *, block_n=None):
    N, D, H, W = x.shape
    HW = H * W
    HWp = ((HW + 127) // 128) * 128          # lane-dense trailing axis
    pad = HWp - HW
    F = w1_5d.shape[0]
    f32 = jnp.float32

    x2d = x.astype(f32).reshape(N, D, HW)
    if pad:
        x2d = jnp.pad(x2d, ((0, 0), (0, 0), (0, pad)))

    # ---- collapse the separable stacks into single 3x3x3 scalar taps ----
    w1 = w1_5d.reshape(F, 3).astype(f32)         # [f, kd]
    w2 = w2_5d.reshape(F, 9).astype(f32)         # [f, kh*3+kw]
    w3 = w3_5d.reshape(F, 2, 3).astype(f32)      # [f, c, kd]
    w4 = w4_5d.reshape(F, 9).astype(f32)
    wc = wc_5d.reshape(3).astype(f32)

    wc1 = jnp.einsum("fk,ft->kt", w1, w2).reshape(27)          # x  -> x1
    wc2x = jnp.einsum("fk,ft->kt", w3[:, 0], w4).reshape(27)   # x  -> x2
    wc2x1 = jnp.einsum("fk,ft->kt", w3[:, 1], w4).reshape(27)  # x1 -> x2
    bs1 = b1.astype(f32) @ w2                                  # (9,)
    bs2 = b3.astype(f32) @ w4                                  # (9,)

    # ---- spatial boundary masks on the flattened (H*W) lane axis ----
    hh = jnp.arange(H)
    ww = jnp.arange(W)
    rows = []
    for kh in range(3):
        vh = ((hh + (kh - 1)) >= 0) & ((hh + (kh - 1)) < H)
        for kw in range(3):
            vw = ((ww + (kw - 1)) >= 0) & ((ww + (kw - 1)) < W)
            rows.append((vh[:, None] & vw[None, :]).reshape(HW))
    masks = jnp.stack(rows).astype(f32)                        # (9, HW)

    # bias of the (3,1,1) conv pushed through the (1,3,3) conv is a constant
    # per-(h,w) field; add the second conv's own bias.
    bf = jnp.stack([b2.astype(f32).reshape(()) + bs1 @ masks,
                    b4.astype(f32).reshape(()) + bs2 @ masks])  # (2, HW)

    if pad:                                  # pad lanes: zero mask, zero bias
        masks = jnp.pad(masks, ((0, 0), (0, pad)))
        bf = jnp.pad(bf, ((0, 0), (0, pad)))

    # ---- fold the spatial mask into the 27 taps -> (27, HWp) weight vectors
    def fold(wvec):
        return (wvec.reshape(3, 9, 1) * masks[None, :, :]).reshape(27, HWp)

    wm1, wm2x, wm2x1 = fold(wc1), fold(wc2x), fold(wc2x1)

    head = jnp.stack([wc[0] + 1.0, wc[1], wc[2],
                      bc.astype(f32).reshape(())])              # (4,)

    # ---- generation-aware blocking ----
    cfg = _target_config()
    vol_bytes = D * HWp * 4
    if block_n is None:
        block_n = _pick_block_n(N, vol_bytes, cfg["step_budget"],
                                cfg["min_steps"])
    grid_n = N // block_n

    block_bytes = block_n * vol_bytes
    const_bytes = (3 * 27 + 2) * HWp * 4
    need = 18 * block_bytes + const_bytes + (8 << 20)
    vmem_limit = int(min(cfg["vmem_cap"], max(32 << 20, need)))

    smem = pl.BlockSpec(memory_space=pltpu.MemorySpace.SMEM)
    const_spec = lambda shape: pl.BlockSpec(shape, lambda n: (0, 0))

    out = pl.pallas_call(
        functools.partial(scrb_kernel, W=W),
        out_shape=jax.ShapeDtypeStruct((N, D, HWp), f32),
        grid=(grid_n,),
        in_specs=[
            pl.BlockSpec((block_n, D, HWp), lambda n: (n, 0, 0)),
            const_spec((27, HWp)),
            const_spec((27, HWp)),
            const_spec((27, HWp)),
            const_spec((2, HWp)),
            smem,
        ],
        out_specs=pl.BlockSpec((block_n, D, HWp), lambda n: (n, 0, 0)),
        compiler_params=pltpu.CompilerParams(
            dimension_semantics=("parallel",),
            vmem_limit_bytes=vmem_limit),
    )(x2d, wm1, wm2x, wm2x1, bf, head)

    return out[:, :, :HW].reshape(N, D, H, W)


# ---------------------------------------------------------------------------
# Pure-JAX reference (mirrors the PyTorch forward exactly)
# ---------------------------------------------------------------------------
def _conv3d_ref(x, w, b, pad):
    y = lax.conv_general_dilated(
        x, w, window_strides=(1, 1, 1),
        padding=[(pad[0], pad[0]), (pad[1], pad[1]), (pad[2], pad[2])],
        dimension_numbers=("NCDHW", "OIDHW", "NCDHW"))
    return y + b[None, :, None, None, None]


def scrb_reference(x, p):
    x5 = x[:, None]                                               # (N,1,D,H,W)
    t = _conv3d_ref(x5, p["w1"], p["b1"], (1, 0, 0))
    x1 = jnp.maximum(_conv3d_ref(t, p["w2"], p["b2"], (0, 1, 1)), 0.0)
    t = _conv3d_ref(jnp.concatenate([x5, x1], axis=1), p["w3"], p["b3"], (1, 0, 0))
    x2 = jnp.maximum(_conv3d_ref(t, p["w4"], p["b4"], (0, 1, 1)), 0.0)
    x3 = _conv3d_ref(jnp.concatenate([x5, x1, x2], axis=1),
                     p["wc"], p["bc"], (0, 0, 0)) + x5
    return x3[:, 0]                                               # squeeze(1)


# ---------------------------------------------------------------------------
if __name__ == "__main__":
    N, D, H, W = 2, 4, 16, 16
    F = 8                                     # n_feats

    key = jax.random.PRNGKey(0)
    ks = jax.random.split(key, 12)

    def init(k, shape, scale=0.1):
        return jax.random.normal(k, shape, jnp.float32) * scale

    x = jax.random.normal(ks[0], (N, D, H, W), jnp.float32)

    # PyTorch Conv3d weight layouts (O, I, kD, kH, kW).
    w1 = init(ks[1], (F, 1, 3, 1, 1)); b1 = init(ks[2], (F,))
    w2 = init(ks[3], (1, F, 1, 3, 3)); b2 = init(ks[4], (1,))
    w3 = init(ks[5], (F, 2, 3, 1, 1)); b3 = init(ks[6], (F,))
    w4 = init(ks[7], (1, F, 1, 3, 3)); b4 = init(ks[8], (1,))
    wc = init(ks[9], (1, 3, 1, 1, 1)); bc = init(ks[10], (1,))

    fwd = jax.jit(scrb_forward)
    out = jax.block_until_ready(
        fwd(x, w1, b1, w2, b2, w3, b3, w4, b4, wc, bc))

    ref = scrb_reference(
        x, dict(w1=w1, b1=b1, w2=w2, b2=b2, w3=w3, b3=b3,
                w4=w4, b4=b4, wc=wc, bc=bc))

    max_err = float(jnp.max(jnp.abs(out - ref)))
    if not bool(jnp.allclose(out, ref, atol=1e-3, rtol=1e-3)):
        raise SystemExit(f"mismatch vs reference, max abs err = {max_err:e}")

    print("KERNEL_OK")
</pallas_src>

<mosaic_0001>
module attributes {stable_mosaic.version = 11 : i64} {
  func.func @scrb_kernel(%arg0: i32, %arg1: memref<1x4x256xf32, #tpu.memory_space<vmem>>, %arg2: memref<27x256xf32, #tpu.memory_space<vmem>>, %arg3: memref<27x256xf32, #tpu.memory_space<vmem>>, %arg4: memref<27x256xf32, #tpu.memory_space<vmem>>, %arg5: memref<2x256xf32, #tpu.memory_space<vmem>>, %arg6: memref<4xf32, #tpu.memory_space<smem>>, %arg7: memref<1x4x256xf32, #tpu.memory_space<vmem>>) attributes {dimension_semantics = [#tpu.dimension_semantics<parallel>], iteration_bounds = array<i64: 2>, scalar_prefetch = 0 : i64, scratch_operands = 0 : i64, tpu.core_type = #tpu.core_type<tc>, window_params = [{transform_indices = @transform_0, window_bounds = array<i64: 1, 4, 256>}, {pipeline_mode = #tpu.pipeline_mode<synchronous>, transform_indices = @transform_1, window_bounds = array<i64: 27, 256>}, {pipeline_mode = #tpu.pipeline_mode<synchronous>, transform_indices = @transform_2, window_bounds = array<i64: 27, 256>}, {pipeline_mode = #tpu.pipeline_mode<synchronous>, transform_indices = @transform_3, window_bounds = array<i64: 27, 256>}, {pipeline_mode = #tpu.pipeline_mode<synchronous>, transform_indices = @transform_4, window_bounds = array<i64: 2, 256>}, {transform_indices = @transform_5, window_bounds = array<i64: 4>}, {transform_indices = @transform_6, window_bounds = array<i64: 1, 4, 256>}]} {
    %c0 = arith.constant 0 : index
    %c0_0 = arith.constant 0 : index
    %c0_1 = arith.constant 0 : index
    %0 = vector.load %arg1[%c0, %c0_0, %c0_1] : memref<1x4x256xf32, #tpu.memory_space<vmem>>, vector<1x4x256xf32>
    %cst = arith.constant 0.000000e+00 : f32
    %1 = vector.broadcast %cst : f32 to vector<1x1x256xf32>
    %2 = vector.extract_strided_slice %0 {offsets = [0, 0, 0], sizes = [1, 3, 256], strides = [1, 1, 1]} : vector<1x4x256xf32> to vector<1x3x256xf32>
    %3 = tpu.concatenate %1, %2 in 1 : vector<1x1x256xf32>, vector<1x3x256xf32> -> vector<1x4x256xf32>
    %4 = vector.extract_strided_slice %0 {offsets = [0, 1, 0], sizes = [1, 3, 256], strides = [1, 1, 1]} : vector<1x4x256xf32> to vector<1x3x256xf32>
    %5 = tpu.concatenate %4, %1 in 1 : vector<1x3x256xf32>, vector<1x1x256xf32> -> vector<1x4x256xf32>
    %c17_i32 = arith.constant 17 : i32
    %6 = tpu.dynamic_rotate %3 by %c17_i32 dim 2 : vector<1x4x256xf32>, i32 -> vector<1x4x256xf32>
    %c17_i32_2 = arith.constant 17 : i32
    %7 = tpu.dynamic_rotate %0 by %c17_i32_2 dim 2 : vector<1x4x256xf32>, i32 -> vector<1x4x256xf32>
    %c17_i32_3 = arith.constant 17 : i32
    %8 = tpu.dynamic_rotate %5 by %c17_i32_3 dim 2 : vector<1x4x256xf32>, i32 -> vector<1x4x256xf32>
    %c0_4 = arith.constant 0 : index
    %c0_5 = arith.constant 0 : index
    %9 = vector.load %arg2[%c0_4, %c0_5] : memref<27x256xf32, #tpu.memory_space<vmem>>, vector<1x256xf32>
    %10 = vector.shape_cast %9 : vector<1x256xf32> to vector<256xf32>
    %11 = vector.shape_cast %10 : vector<256xf32> to vector<1x1x256xf32>
    %12 = vector.broadcast %11 : vector<1x1x256xf32> to vector<1x4x256xf32>
    %13 = arith.mulf %6, %12 : vector<1x4x256xf32>
    %c9 = arith.constant 9 : index
    %c0_6 = arith.constant 0 : index
    %14 = vector.load %arg2[%c9, %c0_6] : memref<27x256xf32, #tpu.memory_space<vmem>>, vector<1x256xf32>
    %15 = vector.shape_cast %14 : vector<1x256xf32> to vector<256xf32>
    %16 = vector.shape_cast %15 : vector<256xf32> to vector<1x1x256xf32>
    %17 = vector.broadcast %16 : vector<1x1x256xf32> to vector<1x4x256xf32>
    %18 = arith.mulf %7, %17 : vector<1x4x256xf32>
    %19 = arith.addf %13, %18 : vector<1x4x256xf32>
    %c18 = arith.constant 18 : index
    %c0_7 = arith.constant 0 : index
    %20 = vector.load %arg2[%c18, %c0_7] : memref<27x256xf32, #tpu.memory_space<vmem>>, vector<1x256xf32>
    %21 = vector.shape_cast %20 : vector<1x256xf32> to vector<256xf32>
    %22 = vector.shape_cast %21 : vector<256xf32> to vector<1x1x256xf32>
    %23 = vector.broadcast %22 : vector<1x1x256xf32> to vector<1x4x256xf32>
    %24 = arith.mulf %8, %23 : vector<1x4x256xf32>
    %25 = arith.addf %19, %24 : vector<1x4x256xf32>
    %c0_8 = arith.constant 0 : index
    %c0_9 = arith.constant 0 : index
    %26 = vector.load %arg3[%c0_8, %c0_9] : memref<27x256xf32, #tpu.memory_space<vmem>>, vector<1x256xf32>
    %27 = vector.shape_cast %26 : vector<1x256xf32> to vector<256xf32>
    %28 = vector.shape_cast %27 : vector<256xf32> to vector<1x1x256xf32>
    %29 = vector.broadcast %28 : vector<1x1x256xf32> to vector<1x4x256xf32>
    %30 = arith.mulf %6, %29 : vector<1x4x256xf32>
    %c9_10 = arith.constant 9 : index
    %c0_11 = arith.constant 0 : index
    %31 = vector.load %arg3[%c9_10, %c0_11] : memref<27x256xf32, #tpu.memory_space<vmem>>, vector<1x256xf32>
    %32 = vector.shape_cast %31 : vector<1x256xf32> to vector<256xf32>
    %33 = vector.shape_cast %32 : vector<256xf32> to vector<1x1x256xf32>
    %34 = vector.broadcast %33 : vector<1x1x256xf32> to vector<1x4x256xf32>
    %35 = arith.mulf %7, %34 : vector<1x4x256xf32>
    %36 = arith.addf %30, %35 : vector<1x4x256xf32>
    %c18_12 = arith.constant 18 : index
    %c0_13 = arith.constant 0 : index
    %37 = vector.load %arg3[%c18_12, %c0_13] : memref<27x256xf32, #tpu.memory_space<vmem>>, vector<1x256xf32>
    %38 = vector.shape_cast %37 : vector<1x256xf32> to vector<256xf32>
    %39 = vector.shape_cast %38 : vector<256xf32> to vector<1x1x256xf32>
    %40 = vector.broadcast %39 : vector<1x1x256xf32> to vector<1x4x256xf32>
    %41 = arith.mulf %8, %40 : vector<1x4x256xf32>
    %42 = arith.addf %36, %41 : vector<1x4x256xf32>
    %c16_i32 = arith.constant 16 : i32
    %43 = tpu.dynamic_rotate %3 by %c16_i32 dim 2 : vector<1x4x256xf32>, i32 -> vector<1x4x256xf32>
    %c16_i32_14 = arith.constant 16 : i32
    %44 = tpu.dynamic_rotate %0 by %c16_i32_14 dim 2 : vector<1x4x256xf32>, i32 -> vector<1x4x256xf32>
    %c16_i32_15 = arith.constant 16 : i32
    %45 = tpu.dynamic_rotate %5 by %c16_i32_15 dim 2 : vector<1x4x256xf32>, i32 -> vector<1x4x256xf32>
    %c1 = arith.constant 1 : index
    %c0_16 = arith.constant 0 : index
    %46 = vector.load %arg2[%c1, %c0_16] : memref<27x256xf32, #tpu.memory_space<vmem>>, vector<1x256xf32>
    %47 = vector.shape_cast %46 : vector<1x256xf32> to vector<256xf32>
    %48 = vector.shape_cast %47 : vector<256xf32> to vector<1x1x256xf32>
    %49 = vector.broadcast %48 : vector<1x1x256xf32> to vector<1x4x256xf32>
    %50 = arith.mulf %43, %49 : vector<1x4x256xf32>
    %c10 = arith.constant 10 : index
    %c0_17 = arith.constant 0 : index
    %51 = vector.load %arg2[%c10, %c0_17] : memref<27x256xf32, #tpu.memory_space<vmem>>, vector<1x256xf32>
    %52 = vector.shape_cast %51 : vector<1x256xf32> to vector<256xf32>
    %53 = vector.shape_cast %52 : vector<256xf32> to vector<1x1x256xf32>
    %54 = vector.broadcast %53 : vector<1x1x256xf32> to vector<1x4x256xf32>
    %55 = arith.mulf %44, %54 : vector<1x4x256xf32>
    %56 = arith.addf %50, %55 : vector<1x4x256xf32>
    %c19 = arith.constant 19 : index
    %c0_18 = arith.constant 0 : index
    %57 = vector.load %arg2[%c19, %c0_18] : memref<27x256xf32, #tpu.memory_space<vmem>>, vector<1x256xf32>
    %58 = vector.shape_cast %57 : vector<1x256xf32> to vector<256xf32>
    %59 = vector.shape_cast %58 : vector<256xf32> to vector<1x1x256xf32>
    %60 = vector.broadcast %59 : vector<1x1x256xf32> to vector<1x4x256xf32>
    %61 = arith.mulf %45, %60 : vector<1x4x256xf32>
    %62 = arith.addf %56, %61 : vector<1x4x256xf32>
    %63 = arith.addf %25, %62 : vector<1x4x256xf32>
    %c1_19 = arith.constant 1 : index
    %c0_20 = arith.constant 0 : index
    %64 = vector.load %arg3[%c1_19, %c0_20] : memref<27x256xf32, #tpu.memory_space<vmem>>, vector<1x256xf32>
    %65 = vector.shape_cast %64 : vector<1x256xf32> to vector<256xf32>
    %66 = vector.shape_cast %65 : vector<256xf32> to vector<1x1x256xf32>
    %67 = vector.broadcast %66 : vector<1x1x256xf32> to vector<1x4x256xf32>
    %68 = arith.mulf %43, %67 : vector<1x4x256xf32>
    %c10_21 = arith.constant 10 : index
    %c0_22 = arith.constant 0 : index
    %69 = vector.load %arg3[%c10_21, %c0_22] : memref<27x256xf32, #tpu.memory_space<vmem>>, vector<1x256xf32>
    %70 = vector.shape_cast %69 : vector<1x256xf32> to vector<256xf32>
    %71 = vector.shape_cast %70 : vector<256xf32> to vector<1x1x256xf32>
    %72 = vector.broadcast %71 : vector<1x1x256xf32> to vector<1x4x256xf32>
    %73 = arith.mulf %44, %72 : vector<1x4x256xf32>
    %74 = arith.addf %68, %73 : vector<1x4x256xf32>
    %c19_23 = arith.constant 19 : index
    %c0_24 = arith.constant 0 : index
    %75 = vector.load %arg3[%c19_23, %c0_24] : memref<27x256xf32, #tpu.memory_space<vmem>>, vector<1x256xf32>
    %76 = vector.shape_cast %75 : vector<1x256xf32> to vector<256xf32>
    %77 = vector.shape_cast %76 : vector<256xf32> to vector<1x1x256xf32>
    %78 = vector.broadcast %77 : vector<1x1x256xf32> to vector<1x4x256xf32>
    %79 = arith.mulf %45, %78 : vector<1x4x256xf32>
    %80 = arith.addf %74, %79 : vector<1x4x256xf32>
    %81 = arith.addf %42, %80 : vector<1x4x256xf32>
    %c15_i32 = arith.constant 15 : i32
    %82 = tpu.dynamic_rotate %3 by %c15_i32 dim 2 : vector<1x4x256xf32>, i32 -> vector<1x4x256xf32>
    %c15_i32_25 = arith.constant 15 : i32
    %83 = tpu.dynamic_rotate %0 by %c15_i32_25 dim 2 : vector<1x4x256xf32>, i32 -> vector<1x4x256xf32>
    %c15_i32_26 = arith.constant 15 : i32
    %84 = tpu.dynamic_rotate %5 by %c15_i32_26 dim 2 : vector<1x4x256xf32>, i32 -> vector<1x4x256xf32>
    %c2 = arith.constant 2 : index
    %c0_27 = arith.constant 0 : index
    %85 = vector.load %arg2[%c2, %c0_27] : memref<27x256xf32, #tpu.memory_space<vmem>>, vector<1x256xf32>
    %86 = vector.shape_cast %85 : vector<1x256xf32> to vector<256xf32>
    %87 = vector.shape_cast %86 : vector<256xf32> to vector<1x1x256xf32>
    %88 = vector.broadcast %87 : vector<1x1x256xf32> to vector<1x4x256xf32>
    %89 = arith.mulf %82, %88 : vector<1x4x256xf32>
    %c11 = arith.constant 11 : index
    %c0_28 = arith.constant 0 : index
    %90 = vector.load %arg2[%c11, %c0_28] : memref<27x256xf32, #tpu.memory_space<vmem>>, vector<1x256xf32>
    %91 = vector.shape_cast %90 : vector<1x256xf32> to vector<256xf32>
    %92 = vector.shape_cast %91 : vector<256xf32> to vector<1x1x256xf32>
    %93 = vector.broadcast %92 : vector<1x1x256xf32> to vector<1x4x256xf32>
    %94 = arith.mulf %83, %93 : vector<1x4x256xf32>
    %95 = arith.addf %89, %94 : vector<1x4x256xf32>
    %c20 = arith.constant 20 : index
    %c0_29 = arith.constant 0 : index
    %96 = vector.load %arg2[%c20, %c0_29] : memref<27x256xf32, #tpu.memory_space<vmem>>, vector<1x256xf32>
    %97 = vector.shape_cast %96 : vector<1x256xf32> to vector<256xf32>
    %98 = vector.shape_cast %97 : vector<256xf32> to vector<1x1x256xf32>
    %99 = vector.broadcast %98 : vector<1x1x256xf32> to vector<1x4x256xf32>
    %100 = arith.mulf %84, %99 : vector<1x4x256xf32>
    %101 = arith.addf %95, %100 : vector<1x4x256xf32>
    %102 = arith.addf %63, %101 : vector<1x4x256xf32>
    %c2_30 = arith.constant 2 : index
    %c0_31 = arith.constant 0 : index
    %103 = vector.load %arg3[%c2_30, %c0_31] : memref<27x256xf32, #tpu.memory_space<vmem>>, vector<1x256xf32>
    %104 = vector.shape_cast %103 : vector<1x256xf32> to vector<256xf32>
    %105 = vector.shape_cast %104 : vector<256xf32> to vector<1x1x256xf32>
    %106 = vector.broadcast %105 : vector<1x1x256xf32> to vector<1x4x256xf32>
    %107 = arith.mulf %82, %106 : vector<1x4x256xf32>
    %c11_32 = arith.constant 11 : index
    %c0_33 = arith.constant 0 : index
    %108 = vector.load %arg3[%c11_32, %c0_33] : memref<27x256xf32, #tpu.memory_space<vmem>>, vector<1x256xf32>
    %109 = vector.shape_cast %108 : vector<1x256xf32> to vector<256xf32>
    %110 = vector.shape_cast %109 : vector<256xf32> to vector<1x1x256xf32>
    %111 = vector.broadcast %110 : vector<1x1x256xf32> to vector<1x4x256xf32>
    %112 = arith.mulf %83, %111 : vector<1x4x256xf32>
    %113 = arith.addf %107, %112 : vector<1x4x256xf32>
    %c20_34 = arith.constant 20 : index
    %c0_35 = arith.constant 0 : index
    %114 = vector.load %arg3[%c20_34, %c0_35] : memref<27x256xf32, #tpu.memory_space<vmem>>, vector<1x256xf32>
    %115 = vector.shape_cast %114 : vector<1x256xf32> to vector<256xf32>
    %116 = vector.shape_cast %115 : vector<256xf32> to vector<1x1x256xf32>
    %117 = vector.broadcast %116 : vector<1x1x256xf32> to vector<1x4x256xf32>
    %118 = arith.mulf %84, %117 : vector<1x4x256xf32>
    %119 = arith.addf %113, %118 : vector<1x4x256xf32>
    %120 = arith.addf %81, %119 : vector<1x4x256xf32>
    %c1_i32 = arith.constant 1 : i32
    %121 = tpu.dynamic_rotate %3 by %c1_i32 dim 2 : vector<1x4x256xf32>, i32 -> vector<1x4x256xf32>
    %c1_i32_36 = arith.constant 1 : i32
    %122 = tpu.dynamic_rotate %0 by %c1_i32_36 dim 2 : vector<1x4x256xf32>, i32 -> vector<1x4x256xf32>
    %c1_i32_37 = arith.constant 1 : i32
    %123 = tpu.dynamic_rotate %5 by %c1_i32_37 dim 2 : vector<1x4x256xf32>, i32 -> vector<1x4x256xf32>
    %c3 = arith.constant 3 : index
    %c0_38 = arith.constant 0 : index
    %124 = vector.load %arg2[%c3, %c0_38] : memref<27x256xf32, #tpu.memory_space<vmem>>, vector<1x256xf32>
    %125 = vector.shape_cast %124 : vector<1x256xf32> to vector<256xf32>
    %126 = vector.shape_cast %125 : vector<256xf32> to vector<1x1x256xf32>
    %127 = vector.broadcast %126 : vector<1x1x256xf32> to vector<1x4x256xf32>
    %128 = arith.mulf %121, %127 : vector<1x4x256xf32>
    %c12 = arith.constant 12 : index
    %c0_39 = arith.constant 0 : index
    %129 = vector.load %arg2[%c12, %c0_39] : memref<27x256xf32, #tpu.memory_space<vmem>>, vector<1x256xf32>
    %130 = vector.shape_cast %129 : vector<1x256xf32> to vector<256xf32>
    %131 = vector.shape_cast %130 : vector<256xf32> to vector<1x1x256xf32>
    %132 = vector.broadcast %131 : vector<1x1x256xf32> to vector<1x4x256xf32>
    %133 = arith.mulf %122, %132 : vector<1x4x256xf32>
    %134 = arith.addf %128, %133 : vector<1x4x256xf32>
    %c21 = arith.constant 21 : index
    %c0_40 = arith.constant 0 : index
    %135 = vector.load %arg2[%c21, %c0_40] : memref<27x256xf32, #tpu.memory_space<vmem>>, vector<1x256xf32>
    %136 = vector.shape_cast %135 : vector<1x256xf32> to vector<256xf32>
    %137 = vector.shape_cast %136 : vector<256xf32> to vector<1x1x256xf32>
    %138 = vector.broadcast %137 : vector<1x1x256xf32> to vector<1x4x256xf32>
    %139 = arith.mulf %123, %138 : vector<1x4x256xf32>
    %140 = arith.addf %134, %139 : vector<1x4x256xf32>
    %141 = arith.addf %102, %140 : vector<1x4x256xf32>
    %c3_41 = arith.constant 3 : index
    %c0_42 = arith.constant 0 : index
    %142 = vector.load %arg3[%c3_41, %c0_42] : memref<27x256xf32, #tpu.memory_space<vmem>>, vector<1x256xf32>
    %143 = vector.shape_cast %142 : vector<1x256xf32> to vector<256xf32>
    %144 = vector.shape_cast %143 : vector<256xf32> to vector<1x1x256xf32>
    %145 = vector.broadcast %144 : vector<1x1x256xf32> to vector<1x4x256xf32>
    %146 = arith.mulf %121, %145 : vector<1x4x256xf32>
    %c12_43 = arith.constant 12 : index
    %c0_44 = arith.constant 0 : index
    %147 = vector.load %arg3[%c12_43, %c0_44] : memref<27x256xf32, #tpu.memory_space<vmem>>, vector<1x256xf32>
    %148 = vector.shape_cast %147 : vector<1x256xf32> to vector<256xf32>
    %149 = vector.shape_cast %148 : vector<256xf32> to vector<1x1x256xf32>
    %150 = vector.broadcast %149 : vector<1x1x256xf32> to vector<1x4x256xf32>
    %151 = arith.mulf %122, %150 : vector<1x4x256xf32>
    %152 = arith.addf %146, %151 : vector<1x4x256xf32>
    %c21_45 = arith.constant 21 : index
    %c0_46 = arith.constant 0 : index
    %153 = vector.load %arg3[%c21_45, %c0_46] : memref<27x256xf32, #tpu.memory_space<vmem>>, vector<1x256xf32>
    %154 = vector.shape_cast %153 : vector<1x256xf32> to vector<256xf32>
    %155 = vector.shape_cast %154 : vector<256xf32> to vector<1x1x256xf32>
    %156 = vector.broadcast %155 : vector<1x1x256xf32> to vector<1x4x256xf32>
    %157 = arith.mulf %123, %156 : vector<1x4x256xf32>
    %158 = arith.addf %152, %157 : vector<1x4x256xf32>
    %159 = arith.addf %120, %158 : vector<1x4x256xf32>
    %c4 = arith.constant 4 : index
    %c0_47 = arith.constant 0 : index
    %160 = vector.load %arg2[%c4, %c0_47] : memref<27x256xf32, #tpu.memory_space<vmem>>, vector<1x256xf32>
    %161 = vector.shape_cast %160 : vector<1x256xf32> to vector<256xf32>
    %162 = vector.shape_cast %161 : vector<256xf32> to vector<1x1x256xf32>
    %163 = vector.broadcast %162 : vector<1x1x256xf32> to vector<1x4x256xf32>
    %164 = arith.mulf %3, %163 : vector<1x4x256xf32>
    %c13 = arith.constant 13 : index
    %c0_48 = arith.constant 0 : index
    %165 = vector.load %arg2[%c13, %c0_48] : memref<27x256xf32, #tpu.memory_space<vmem>>, vector<1x256xf32>
    %166 = vector.shape_cast %165 : vector<1x256xf32> to vector<256xf32>
    %167 = vector.shape_cast %166 : vector<256xf32> to vector<1x1x256xf32>
    %168 = vector.broadcast %167 : vector<1x1x256xf32> to vector<1x4x256xf32>
    %169 = arith.mulf %0, %168 : vector<1x4x256xf32>
    %170 = arith.addf %164, %169 : vector<1x4x256xf32>
    %c22 = arith.constant 22 : index
    %c0_49 = arith.constant 0 : index
    %171 = vector.load %arg2[%c22, %c0_49] : memref<27x256xf32, #tpu.memory_space<vmem>>, vector<1x256xf32>
    %172 = vector.shape_cast %171 : vector<1x256xf32> to vector<256xf32>
    %173 = vector.shape_cast %172 : vector<256xf32> to vector<1x1x256xf32>
    %174 = vector.broadcast %173 : vector<1x1x256xf32> to vector<1x4x256xf32>
    %175 = arith.mulf %5, %174 : vector<1x4x256xf32>
    %176 = arith.addf %170, %175 : vector<1x4x256xf32>
    %177 = arith.addf %141, %176 : vector<1x4x256xf32>
    %c4_50 = arith.constant 4 : index
    %c0_51 = arith.constant 0 : index
    %178 = vector.load %arg3[%c4_50, %c0_51] : memref<27x256xf32, #tpu.memory_space<vmem>>, vector<1x256xf32>
    %179 = vector.shape_cast %178 : vector<1x256xf32> to vector<256xf32>
    %180 = vector.shape_cast %179 : vector<256xf32> to vector<1x1x256xf32>
    %181 = vector.broadcast %180 : vector<1x1x256xf32> to vector<1x4x256xf32>
    %182 = arith.mulf %3, %181 : vector<1x4x256xf32>
    %c13_52 = arith.constant 13 : index
    %c0_53 = arith.constant 0 : index
    %183 = vector.load %arg3[%c13_52, %c0_53] : memref<27x256xf32, #tpu.memory_space<vmem>>, vector<1x256xf32>
    %184 = vector.shape_cast %183 : vector<1x256xf32> to vector<256xf32>
    %185 = vector.shape_cast %184 : vector<256xf32> to vector<1x1x256xf32>
    %186 = vector.broadcast %185 : vector<1x1x256xf32> to vector<1x4x256xf32>
    %187 = arith.mulf %0, %186 : vector<1x4x256xf32>
    %188 = arith.addf %182, %187 : vector<1x4x256xf32>
    %c22_54 = arith.constant 22 : index
    %c0_55 = arith.constant 0 : index
    %189 = vector.load %arg3[%c22_54, %c0_55] : memref<27x256xf32, #tpu.memory_space<vmem>>, vector<1x256xf32>
    %190 = vector.shape_cast %189 : vector<1x256xf32> to vector<256xf32>
    %191 = vector.shape_cast %190 : vector<256xf32> to vector<1x1x256xf32>
    %192 = vector.broadcast %191 : vector<1x1x256xf32> to vector<1x4x256xf32>
    %193 = arith.mulf %5, %192 : vector<1x4x256xf32>
    %194 = arith.addf %188, %193 : vector<1x4x256xf32>
    %195 = arith.addf %159, %194 : vector<1x4x256xf32>
    %c255_i32 = arith.constant 255 : i32
    %196 = tpu.dynamic_rotate %3 by %c255_i32 dim 2 : vector<1x4x256xf32>, i32 -> vector<1x4x256xf32>
    %c255_i32_56 = arith.constant 255 : i32
    %197 = tpu.dynamic_rotate %0 by %c255_i32_56 dim 2 : vector<1x4x256xf32>, i32 -> vector<1x4x256xf32>
    %c255_i32_57 = arith.constant 255 : i32
    %198 = tpu.dynamic_rotate %5 by %c255_i32_57 dim 2 : vector<1x4x256xf32>, i32 -> vector<1x4x256xf32>
    %c5 = arith.constant 5 : index
    %c0_58 = arith.constant 0 : index
    %199 = vector.load %arg2[%c5, %c0_58] : memref<27x256xf32, #tpu.memory_space<vmem>>, vector<1x256xf32>
    %200 = vector.shape_cast %199 : vector<1x256xf32> to vector<256xf32>
    %201 = vector.shape_cast %200 : vector<256xf32> to vector<1x1x256xf32>
    %202 = vector.broadcast %201 : vector<1x1x256xf32> to vector<1x4x256xf32>
    %203 = arith.mulf %196, %202 : vector<1x4x256xf32>
    %c14 = arith.constant 14 : index
    %c0_59 = arith.constant 0 : index
    %204 = vector.load %arg2[%c14, %c0_59] : memref<27x256xf32, #tpu.memory_space<vmem>>, vector<1x256xf32>
    %205 = vector.shape_cast %204 : vector<1x256xf32> to vector<256xf32>
    %206 = vector.shape_cast %205 : vector<256xf32> to vector<1x1x256xf32>
    %207 = vector.broadcast %206 : vector<1x1x256xf32> to vector<1x4x256xf32>
    %208 = arith.mulf %197, %207 : vector<1x4x256xf32>
    %209 = arith.addf %203, %208 : vector<1x4x256xf32>
    %c23 = arith.constant 23 : index
    %c0_60 = arith.constant 0 : index
    %210 = vector.load %arg2[%c23, %c0_60] : memref<27x256xf32, #tpu.memory_space<vmem>>, vector<1x256xf32>
    %211 = vector.shape_cast %210 : vector<1x256xf32> to vector<256xf32>
    %212 = vector.shape_cast %211 : vector<256xf32> to vector<1x1x256xf32>
    %213 = vector.broadcast %212 : vector<1x1x256xf32> to vector<1x4x256xf32>
    %214 = arith.mulf %198, %213 : vector<1x4x256xf32>
    %215 = arith.addf %209, %214 : vector<1x4x256xf32>
    %216 = arith.addf %177, %215 : vector<1x4x256xf32>
    %c5_61 = arith.constant 5 : index
    %c0_62 = arith.constant 0 : index
    %217 = vector.load %arg3[%c5_61, %c0_62] : memref<27x256xf32, #tpu.memory_space<vmem>>, vector<1x256xf32>
    %218 = vector.shape_cast %217 : vector<1x256xf32> to vector<256xf32>
    %219 = vector.shape_cast %218 : vector<256xf32> to vector<1x1x256xf32>
    %220 = vector.broadcast %219 : vector<1x1x256xf32> to vector<1x4x256xf32>
    %221 = arith.mulf %196, %220 : vector<1x4x256xf32>
    %c14_63 = arith.constant 14 : index
    %c0_64 = arith.constant 0 : index
    %222 = vector.load %arg3[%c14_63, %c0_64] : memref<27x256xf32, #tpu.memory_space<vmem>>, vector<1x256xf32>
    %223 = vector.shape_cast %222 : vector<1x256xf32> to vector<256xf32>
    %224 = vector.shape_cast %223 : vector<256xf32> to vector<1x1x256xf32>
    %225 = vector.broadcast %224 : vector<1x1x256xf32> to vector<1x4x256xf32>
    %226 = arith.mulf %197, %225 : vector<1x4x256xf32>
    %227 = arith.addf %221, %226 : vector<1x4x256xf32>
    %c23_65 = arith.constant 23 : index
    %c0_66 = arith.constant 0 : index
    %228 = vector.load %arg3[%c23_65, %c0_66] : memref<27x256xf32, #tpu.memory_space<vmem>>, vector<1x256xf32>
    %229 = vector.shape_cast %228 : vector<1x256xf32> to vector<256xf32>
    %230 = vector.shape_cast %229 : vector<256xf32> to vector<1x1x256xf32>
    %231 = vector.broadcast %230 : vector<1x1x256xf32> to vector<1x4x256xf32>
    %232 = arith.mulf %198, %231 : vector<1x4x256xf32>
    %233 = arith.addf %227, %232 : vector<1x4x256xf32>
    %234 = arith.addf %195, %233 : vector<1x4x256xf32>
    %c241_i32 = arith.constant 241 : i32
    %235 = tpu.dynamic_rotate %3 by %c241_i32 dim 2 : vector<1x4x256xf32>, i32 -> vector<1x4x256xf32>
    %c241_i32_67 = arith.constant 241 : i32
    %236 = tpu.dynamic_rotate %0 by %c241_i32_67 dim 2 : vector<1x4x256xf32>, i32 -> vector<1x4x256xf32>
    %c241_i32_68 = arith.constant 241 : i32
    %237 = tpu.dynamic_rotate %5 by %c241_i32_68 dim 2 : vector<1x4x256xf32>, i32 -> vector<1x4x256xf32>
    %c6 = arith.constant 6 : index
    %c0_69 = arith.constant 0 : index
    %238 = vector.load %arg2[%c6, %c0_69] : memref<27x256xf32, #tpu.memory_space<vmem>>, vector<1x256xf32>
    %239 = vector.shape_cast %238 : vector<1x256xf32> to vector<256xf32>
    %240 = vector.shape_cast %239 : vector<256xf32> to vector<1x1x256xf32>
    %241 = vector.broadcast %240 : vector<1x1x256xf32> to vector<1x4x256xf32>
    %242 = arith.mulf %235, %241 : vector<1x4x256xf32>
    %c15 = arith.constant 15 : index
    %c0_70 = arith.constant 0 : index
    %243 = vector.load %arg2[%c15, %c0_70] : memref<27x256xf32, #tpu.memory_space<vmem>>, vector<1x256xf32>
    %244 = vector.shape_cast %243 : vector<1x256xf32> to vector<256xf32>
    %245 = vector.shape_cast %244 : vector<256xf32> to vector<1x1x256xf32>
    %246 = vector.broadcast %245 : vector<1x1x256xf32> to vector<1x4x256xf32>
    %247 = arith.mulf %236, %246 : vector<1x4x256xf32>
    %248 = arith.addf %242, %247 : vector<1x4x256xf32>
    %c24 = arith.constant 24 : index
    %c0_71 = arith.constant 0 : index
    %249 = vector.load %arg2[%c24, %c0_71] : memref<27x256xf32, #tpu.memory_space<vmem>>, vector<1x256xf32>
    %250 = vector.shape_cast %249 : vector<1x256xf32> to vector<256xf32>
    %251 = vector.shape_cast %250 : vector<256xf32> to vector<1x1x256xf32>
    %252 = vector.broadcast %251 : vector<1x1x256xf32> to vector<1x4x256xf32>
    %253 = arith.mulf %237, %252 : vector<1x4x256xf32>
    %254 = arith.addf %248, %253 : vector<1x4x256xf32>
    %255 = arith.addf %216, %254 : vector<1x4x256xf32>
    %c6_72 = arith.constant 6 : index
    %c0_73 = arith.constant 0 : index
    %256 = vector.load %arg3[%c6_72, %c0_73] : memref<27x256xf32, #tpu.memory_space<vmem>>, vector<1x256xf32>
    %257 = vector.shape_cast %256 : vector<1x256xf32> to vector<256xf32>
    %258 = vector.shape_cast %257 : vector<256xf32> to vector<1x1x256xf32>
    %259 = vector.broadcast %258 : vector<1x1x256xf32> to vector<1x4x256xf32>
    %260 = arith.mulf %235, %259 : vector<1x4x256xf32>
    %c15_74 = arith.constant 15 : index
    %c0_75 = arith.constant 0 : index
    %261 = vector.load %arg3[%c15_74, %c0_75] : memref<27x256xf32, #tpu.memory_space<vmem>>, vector<1x256xf32>
    %262 = vector.shape_cast %261 : vector<1x256xf32> to vector<256xf32>
    %263 = vector.shape_cast %262 : vector<256xf32> to vector<1x1x256xf32>
    %264 = vector.broadcast %263 : vector<1x1x256xf32> to vector<1x4x256xf32>
    %265 = arith.mulf %236, %264 : vector<1x4x256xf32>
    %266 = arith.addf %260, %265 : vector<1x4x256xf32>
    %c24_76 = arith.constant 24 : index
    %c0_77 = arith.constant 0 : index
    %267 = vector.load %arg3[%c24_76, %c0_77] : memref<27x256xf32, #tpu.memory_space<vmem>>, vector<1x256xf32>
    %268 = vector.shape_cast %267 : vector<1x256xf32> to vector<256xf32>
    %269 = vector.shape_cast %268 : vector<256xf32> to vector<1x1x256xf32>
    %270 = vector.broadcast %269 : vector<1x1x256xf32> to vector<1x4x256xf32>
    %271 = arith.mulf %237, %270 : vector<1x4x256xf32>
    %272 = arith.addf %266, %271 : vector<1x4x256xf32>
    %273 = arith.addf %234, %272 : vector<1x4x256xf32>
    %c240_i32 = arith.constant 240 : i32
    %274 = tpu.dynamic_rotate %3 by %c240_i32 dim 2 : vector<1x4x256xf32>, i32 -> vector<1x4x256xf32>
    %c240_i32_78 = arith.constant 240 : i32
    %275 = tpu.dynamic_rotate %0 by %c240_i32_78 dim 2 : vector<1x4x256xf32>, i32 -> vector<1x4x256xf32>
    %c240_i32_79 = arith.constant 240 : i32
    %276 = tpu.dynamic_rotate %5 by %c240_i32_79 dim 2 : vector<1x4x256xf32>, i32 -> vector<1x4x256xf32>
    %c7 = arith.constant 7 : index
    %c0_80 = arith.constant 0 : index
    %277 = vector.load %arg2[%c7, %c0_80] : memref<27x256xf32, #tpu.memory_space<vmem>>, vector<1x256xf32>
    %278 = vector.shape_cast %277 : vector<1x256xf32> to vector<256xf32>
    %279 = vector.shape_cast %278 : vector<256xf32> to vector<1x1x256xf32>
    %280 = vector.broadcast %279 : vector<1x1x256xf32> to vector<1x4x256xf32>
    %281 = arith.mulf %274, %280 : vector<1x4x256xf32>
    %c16 = arith.constant 16 : index
    %c0_81 = arith.constant 0 : index
    %282 = vector.load %arg2[%c16, %c0_81] : memref<27x256xf32, #tpu.memory_space<vmem>>, vector<1x256xf32>
    %283 = vector.shape_cast %282 : vector<1x256xf32> to vector<256xf32>
    %284 = vector.shape_cast %283 : vector<256xf32> to vector<1x1x256xf32>
    %285 = vector.broadcast %284 : vector<1x1x256xf32> to vector<1x4x256xf32>
    %286 = arith.mulf %275, %285 : vector<1x4x256xf32>
    %287 = arith.addf %281, %286 : vector<1x4x256xf32>
    %c25 = arith.constant 25 : index
    %c0_82 = arith.constant 0 : index
    %288 = vector.load %arg2[%c25, %c0_82] : memref<27x256xf32, #tpu.memory_space<vmem>>, vector<1x256xf32>
    %289 = vector.shape_cast %288 : vector<1x256xf32> to vector<256xf32>
    %290 = vector.shape_cast %289 : vector<256xf32> to vector<1x1x256xf32>
    %291 = vector.broadcast %290 : vector<1x1x256xf32> to vector<1x4x256xf32>
    %292 = arith.mulf %276, %291 : vector<1x4x256xf32>
    %293 = arith.addf %287, %292 : vector<1x4x256xf32>
    %294 = arith.addf %255, %293 : vector<1x4x256xf32>
    %c7_83 = arith.constant 7 : index
    %c0_84 = arith.constant 0 : index
    %295 = vector.load %arg3[%c7_83, %c0_84] : memref<27x256xf32, #tpu.memory_space<vmem>>, vector<1x256xf32>
    %296 = vector.shape_cast %295 : vector<1x256xf32> to vector<256xf32>
    %297 = vector.shape_cast %296 : vector<256xf32> to vector<1x1x256xf32>
    %298 = vector.broadcast %297 : vector<1x1x256xf32> to vector<1x4x256xf32>
    %299 = arith.mulf %274, %298 : vector<1x4x256xf32>
    %c16_85 = arith.constant 16 : index
    %c0_86 = arith.constant 0 : index
    %300 = vector.load %arg3[%c16_85, %c0_86] : memref<27x256xf32, #tpu.memory_space<vmem>>, vector<1x256xf32>
    %301 = vector.shape_cast %300 : vector<1x256xf32> to vector<256xf32>
    %302 = vector.shape_cast %301 : vector<256xf32> to vector<1x1x256xf32>
    %303 = vector.broadcast %302 : vector<1x1x256xf32> to vector<1x4x256xf32>
    %304 = arith.mulf %275, %303 : vector<1x4x256xf32>
    %305 = arith.addf %299, %304 : vector<1x4x256xf32>
    %c25_87 = arith.constant 25 : index
    %c0_88 = arith.constant 0 : index
    %306 = vector.load %arg3[%c25_87, %c0_88] : memref<27x256xf32, #tpu.memory_space<vmem>>, vector<1x256xf32>
    %307 = vector.shape_cast %306 : vector<1x256xf32> to vector<256xf32>
    %308 = vector.shape_cast %307 : vector<256xf32> to vector<1x1x256xf32>
    %309 = vector.broadcast %308 : vector<1x1x256xf32> to vector<1x4x256xf32>
    %310 = arith.mulf %276, %309 : vector<1x4x256xf32>
    %311 = arith.addf %305, %310 : vector<1x4x256xf32>
    %312 = arith.addf %273, %311 : vector<1x4x256xf32>
    %c239_i32 = arith.constant 239 : i32
    %313 = tpu.dynamic_rotate %3 by %c239_i32 dim 2 : vector<1x4x256xf32>, i32 -> vector<1x4x256xf32>
    %c239_i32_89 = arith.constant 239 : i32
    %314 = tpu.dynamic_rotate %0 by %c239_i32_89 dim 2 : vector<1x4x256xf32>, i32 -> vector<1x4x256xf32>
    %c239_i32_90 = arith.constant 239 : i32
    %315 = tpu.dynamic_rotate %5 by %c239_i32_90 dim 2 : vector<1x4x256xf32>, i32 -> vector<1x4x256xf32>
    %c8 = arith.constant 8 : index
    %c0_91 = arith.constant 0 : index
    %316 = vector.load %arg2[%c8, %c0_91] : memref<27x256xf32, #tpu.memory_space<vmem>>, vector<1x256xf32>
    %317 = vector.shape_cast %316 : vector<1x256xf32> to vector<256xf32>
    %318 = vector.shape_cast %317 : vector<256xf32> to vector<1x1x256xf32>
    %319 = vector.broadcast %318 : vector<1x1x256xf32> to vector<1x4x256xf32>
    %320 = arith.mulf %313, %319 : vector<1x4x256xf32>
    %c17 = arith.constant 17 : index
    %c0_92 = arith.constant 0 : index
    %321 = vector.load %arg2[%c17, %c0_92] : memref<27x256xf32, #tpu.memory_space<vmem>>, vector<1x256xf32>
    %322 = vector.shape_cast %321 : vector<1x256xf32> to vector<256xf32>
    %323 = vector.shape_cast %322 : vector<256xf32> to vector<1x1x256xf32>
    %324 = vector.broadcast %323 : vector<1x1x256xf32> to vector<1x4x256xf32>
    %325 = arith.mulf %314, %324 : vector<1x4x256xf32>
    %326 = arith.addf %320, %325 : vector<1x4x256xf32>
    %c26 = arith.constant 26 : index
    %c0_93 = arith.constant 0 : index
    %327 = vector.load %arg2[%c26, %c0_93] : memref<27x256xf32, #tpu.memory_space<vmem>>, vector<1x256xf32>
    %328 = vector.shape_cast %327 : vector<1x256xf32> to vector<256xf32>
    %329 = vector.shape_cast %328 : vector<256xf32> to vector<1x1x256xf32>
    %330 = vector.broadcast %329 : vector<1x1x256xf32> to vector<1x4x256xf32>
    %331 = arith.mulf %315, %330 : vector<1x4x256xf32>
    %332 = arith.addf %326, %331 : vector<1x4x256xf32>
    %333 = arith.addf %294, %332 : vector<1x4x256xf32>
    %c8_94 = arith.constant 8 : index
    %c0_95 = arith.constant 0 : index
    %334 = vector.load %arg3[%c8_94, %c0_95] : memref<27x256xf32, #tpu.memory_space<vmem>>, vector<1x256xf32>
    %335 = vector.shape_cast %334 : vector<1x256xf32> to vector<256xf32>
    %336 = vector.shape_cast %335 : vector<256xf32> to vector<1x1x256xf32>
    %337 = vector.broadcast %336 : vector<1x1x256xf32> to vector<1x4x256xf32>
    %338 = arith.mulf %313, %337 : vector<1x4x256xf32>
    %c17_96 = arith.constant 17 : index
    %c0_97 = arith.constant 0 : index
    %339 = vector.load %arg3[%c17_96, %c0_97] : memref<27x256xf32, #tpu.memory_space<vmem>>, vector<1x256xf32>
    %340 = vector.shape_cast %339 : vector<1x256xf32> to vector<256xf32>
    %341 = vector.shape_cast %340 : vector<256xf32> to vector<1x1x256xf32>
    %342 = vector.broadcast %341 : vector<1x1x256xf32> to vector<1x4x256xf32>
    %343 = arith.mulf %314, %342 : vector<1x4x256xf32>
    %344 = arith.addf %338, %343 : vector<1x4x256xf32>
    %c26_98 = arith.constant 26 : index
    %c0_99 = arith.constant 0 : index
    %345 = vector.load %arg3[%c26_98, %c0_99] : memref<27x256xf32, #tpu.memory_space<vmem>>, vector<1x256xf32>
    %346 = vector.shape_cast %345 : vector<1x256xf32> to vector<256xf32>
    %347 = vector.shape_cast %346 : vector<256xf32> to vector<1x1x256xf32>
    %348 = vector.broadcast %347 : vector<1x1x256xf32> to vector<1x4x256xf32>
    %349 = arith.mulf %315, %348 : vector<1x4x256xf32>
    %350 = arith.addf %344, %349 : vector<1x4x256xf32>
    %351 = arith.addf %312, %350 : vector<1x4x256xf32>
    %c0_100 = arith.constant 0 : index
    %c0_101 = arith.constant 0 : index
    %352 = vector.load %arg5[%c0_100, %c0_101] : memref<2x256xf32, #tpu.memory_space<vmem>>, vector<1x256xf32>
    %353 = vector.shape_cast %352 : vector<1x256xf32> to vector<256xf32>
    %354 = vector.shape_cast %353 : vector<256xf32> to vector<1x1x256xf32>
    %355 = vector.broadcast %354 : vector<1x1x256xf32> to vector<1x4x256xf32>
    %356 = arith.addf %333, %355 : vector<1x4x256xf32>
    %cst_102 = arith.constant 0.000000e+00 : f32
    %357 = vector.broadcast %cst_102 : f32 to vector<1x4x256xf32>
    %358 = arith.maximumf %356, %357 : vector<1x4x256xf32>
    %359 = vector.extract_strided_slice %358 {offsets = [0, 0, 0], sizes = [1, 3, 256], strides = [1, 1, 1]} : vector<1x4x256xf32> to vector<1x3x256xf32>
    %360 = tpu.concatenate %1, %359 in 1 : vector<1x1x256xf32>, vector<1x3x256xf32> -> vector<1x4x256xf32>
    %361 = vector.extract_strided_slice %358 {offsets = [0, 1, 0], sizes = [1, 3, 256], strides = [1, 1, 1]} : vector<1x4x256xf32> to vector<1x3x256xf32>
    %362 = tpu.concatenate %361, %1 in 1 : vector<1x3x256xf32>, vector<1x1x256xf32> -> vector<1x4x256xf32>
    %c17_i32_103 = arith.constant 17 : i32
    %363 = tpu.dynamic_rotate %360 by %c17_i32_103 dim 2 : vector<1x4x256xf32>, i32 -> vector<1x4x256xf32>
    %c17_i32_104 = arith.constant 17 : i32
    %364 = tpu.dynamic_rotate %358 by %c17_i32_104 dim 2 : vector<1x4x256xf32>, i32 -> vector<1x4x256xf32>
    %c17_i32_105 = arith.constant 17 : i32
    %365 = tpu.dynamic_rotate %362 by %c17_i32_105 dim 2 : vector<1x4x256xf32>, i32 -> vector<1x4x256xf32>
    %c0_106 = arith.constant 0 : index
    %c0_107 = arith.constant 0 : index
    %366 = vector.load %arg4[%c0_106, %c0_107] : memref<27x256xf32, #tpu.memory_space<vmem>>, vector<1x256xf32>
    %367 = vector.shape_cast %366 : vector<1x256xf32> to vector<256xf32>
    %368 = vector.shape_cast %367 : vector<256xf32> to vector<1x1x256xf32>
    %369 = vector.broadcast %368 : vector<1x1x256xf32> to vector<1x4x256xf32>
    %370 = arith.mulf %363, %369 : vector<1x4x256xf32>
    %c9_108 = arith.constant 9 : index
    %c0_109 = arith.constant 0 : index
    %371 = vector.load %arg4[%c9_108, %c0_109] : memref<27x256xf32, #tpu.memory_space<vmem>>, vector<1x256xf32>
    %372 = vector.shape_cast %371 : vector<1x256xf32> to vector<256xf32>
    %373 = vector.shape_cast %372 : vector<256xf32> to vector<1x1x256xf32>
    %374 = vector.broadcast %373 : vector<1x1x256xf32> to vector<1x4x256xf32>
    %375 = arith.mulf %364, %374 : vector<1x4x256xf32>
    %376 = arith.addf %370, %375 : vector<1x4x256xf32>
    %c18_110 = arith.constant 18 : index
    %c0_111 = arith.constant 0 : index
    %377 = vector.load %arg4[%c18_110, %c0_111] : memref<27x256xf32, #tpu.memory_space<vmem>>, vector<1x256xf32>
    %378 = vector.shape_cast %377 : vector<1x256xf32> to vector<256xf32>
    %379 = vector.shape_cast %378 : vector<256xf32> to vector<1x1x256xf32>
    %380 = vector.broadcast %379 : vector<1x1x256xf32> to vector<1x4x256xf32>
    %381 = arith.mulf %365, %380 : vector<1x4x256xf32>
    %382 = arith.addf %376, %381 : vector<1x4x256xf32>
    %383 = arith.addf %351, %382 : vector<1x4x256xf32>
    %c16_i32_112 = arith.constant 16 : i32
    %384 = tpu.dynamic_rotate %360 by %c16_i32_112 dim 2 : vector<1x4x256xf32>, i32 -> vector<1x4x256xf32>
    %c16_i32_113 = arith.constant 16 : i32
    %385 = tpu.dynamic_rotate %358 by %c16_i32_113 dim 2 : vector<1x4x256xf32>, i32 -> vector<1x4x256xf32>
    %c16_i32_114 = arith.constant 16 : i32
    %386 = tpu.dynamic_rotate %362 by %c16_i32_114 dim 2 : vector<1x4x256xf32>, i32 -> vector<1x4x256xf32>
    %c1_115 = arith.constant 1 : index
    %c0_116 = arith.constant 0 : index
    %387 = vector.load %arg4[%c1_115, %c0_116] : memref<27x256xf32, #tpu.memory_space<vmem>>, vector<1x256xf32>
    %388 = vector.shape_cast %387 : vector<1x256xf32> to vector<256xf32>
    %389 = vector.shape_cast %388 : vector<256xf32> to vector<1x1x256xf32>
    %390 = vector.broadcast %389 : vector<1x1x256xf32> to vector<1x4x256xf32>
    %391 = arith.mulf %384, %390 : vector<1x4x256xf32>
    %c10_117 = arith.constant 10 : index
    %c0_118 = arith.constant 0 : index
    %392 = vector.load %arg4[%c10_117, %c0_118] : memref<27x256xf32, #tpu.memory_space<vmem>>, vector<1x256xf32>
    %393 = vector.shape_cast %392 : vector<1x256xf32> to vector<256xf32>
    %394 = vector.shape_cast %393 : vector<256xf32> to vector<1x1x256xf32>
    %395 = vector.broadcast %394 : vector<1x1x256xf32> to vector<1x4x256xf32>
    %396 = arith.mulf %385, %395 : vector<1x4x256xf32>
    %397 = arith.addf %391, %396 : vector<1x4x256xf32>
    %c19_119 = arith.constant 19 : index
    %c0_120 = arith.constant 0 : index
    %398 = vector.load %arg4[%c19_119, %c0_120] : memref<27x256xf32, #tpu.memory_space<vmem>>, vector<1x256xf32>
    %399 = vector.shape_cast %398 : vector<1x256xf32> to vector<256xf32>
    %400 = vector.shape_cast %399 : vector<256xf32> to vector<1x1x256xf32>
    %401 = vector.broadcast %400 : vector<1x1x256xf32> to vector<1x4x256xf32>
    %402 = arith.mulf %386, %401 : vector<1x4x256xf32>
    %403 = arith.addf %397, %402 : vector<1x4x256xf32>
    %404 = arith.addf %383, %403 : vector<1x4x256xf32>
    %c15_i32_121 = arith.constant 15 : i32
    %405 = tpu.dynamic_rotate %360 by %c15_i32_121 dim 2 : vector<1x4x256xf32>, i32 -> vector<1x4x256xf32>
    %c15_i32_122 = arith.constant 15 : i32
    %406 = tpu.dynamic_rotate %358 by %c15_i32_122 dim 2 : vector<1x4x256xf32>, i32 -> vector<1x4x256xf32>
    %c15_i32_123 = arith.constant 15 : i32
    %407 = tpu.dynamic_rotate %362 by %c15_i32_123 dim 2 : vector<1x4x256xf32>, i32 -> vector<1x4x256xf32>
    %c2_124 = arith.constant 2 : index
    %c0_125 = arith.constant 0 : index
    %408 = vector.load %arg4[%c2_124, %c0_125] : memref<27x256xf32, #tpu.memory_space<vmem>>, vector<1x256xf32>
    %409 = vector.shape_cast %408 : vector<1x256xf32> to vector<256xf32>
    %410 = vector.shape_cast %409 : vector<256xf32> to vector<1x1x256xf32>
    %411 = vector.broadcast %410 : vector<1x1x256xf32> to vector<1x4x256xf32>
    %412 = arith.mulf %405, %411 : vector<1x4x256xf32>
    %c11_126 = arith.constant 11 : index
    %c0_127 = arith.constant 0 : index
    %413 = vector.load %arg4[%c11_126, %c0_127] : memref<27x256xf32, #tpu.memory_space<vmem>>, vector<1x256xf32>
    %414 = vector.shape_cast %413 : vector<1x256xf32> to vector<256xf32>
    %415 = vector.shape_cast %414 : vector<256xf32> to vector<1x1x256xf32>
    %416 = vector.broadcast %415 : vector<1x1x256xf32> to vector<1x4x256xf32>
    %417 = arith.mulf %406, %416 : vector<1x4x256xf32>
    %418 = arith.addf %412, %417 : vector<1x4x256xf32>
    %c20_128 = arith.constant 20 : index
    %c0_129 = arith.constant 0 : index
    %419 = vector.load %arg4[%c20_128, %c0_129] : memref<27x256xf32, #tpu.memory_space<vmem>>, vector<1x256xf32>
    %420 = vector.shape_cast %419 : vector<1x256xf32> to vector<256xf32>
    %421 = vector.shape_cast %420 : vector<256xf32> to vector<1x1x256xf32>
    %422 = vector.broadcast %421 : vector<1x1x256xf32> to vector<1x4x256xf32>
    %423 = arith.mulf %407, %422 : vector<1x4x256xf32>
    %424 = arith.addf %418, %423 : vector<1x4x256xf32>
    %425 = arith.addf %404, %424 : vector<1x4x256xf32>
    %c1_i32_130 = arith.constant 1 : i32
    %426 = tpu.dynamic_rotate %360 by %c1_i32_130 dim 2 : vector<1x4x256xf32>, i32 -> vector<1x4x256xf32>
    %c1_i32_131 = arith.constant 1 : i32
    %427 = tpu.dynamic_rotate %358 by %c1_i32_131 dim 2 : vector<1x4x256xf32>, i32 -> vector<1x4x256xf32>
    %c1_i32_132 = arith.constant 1 : i32
    %428 = tpu.dynamic_rotate %362 by %c1_i32_132 dim 2 : vector<1x4x256xf32>, i32 -> vector<1x4x256xf32>
    %c3_133 = arith.constant 3 : index
    %c0_134 = arith.constant 0 : index
    %429 = vector.load %arg4[%c3_133, %c0_134] : memref<27x256xf32, #tpu.memory_space<vmem>>, vector<1x256xf32>
    %430 = vector.shape_cast %429 : vector<1x256xf32> to vector<256xf32>
    %431 = vector.shape_cast %430 : vector<256xf32> to vector<1x1x256xf32>
    %432 = vector.broadcast %431 : vector<1x1x256xf32> to vector<1x4x256xf32>
    %433 = arith.mulf %426, %432 : vector<1x4x256xf32>
    %c12_135 = arith.constant 12 : index
    %c0_136 = arith.constant 0 : index
    %434 = vector.load %arg4[%c12_135, %c0_136] : memref<27x256xf32, #tpu.memory_space<vmem>>, vector<1x256xf32>
    %435 = vector.shape_cast %434 : vector<1x256xf32> to vector<256xf32>
    %436 = vector.shape_cast %435 : vector<256xf32> to vector<1x1x256xf32>
    %437 = vector.broadcast %436 : vector<1x1x256xf32> to vector<1x4x256xf32>
    %438 = arith.mulf %427, %437 : vector<1x4x256xf32>
    %439 = arith.addf %433, %438 : vector<1x4x256xf32>
    %c21_137 = arith.constant 21 : index
    %c0_138 = arith.constant 0 : index
    %440 = vector.load %arg4[%c21_137, %c0_138] : memref<27x256xf32, #tpu.memory_space<vmem>>, vector<1x256xf32>
    %441 = vector.shape_cast %440 : vector<1x256xf32> to vector<256xf32>
    %442 = vector.shape_cast %441 : vector<256xf32> to vector<1x1x256xf32>
    %443 = vector.broadcast %442 : vector<1x1x256xf32> to vector<1x4x256xf32>
    %444 = arith.mulf %428, %443 : vector<1x4x256xf32>
    %445 = arith.addf %439, %444 : vector<1x4x256xf32>
    %446 = arith.addf %425, %445 : vector<1x4x256xf32>
    %c4_139 = arith.constant 4 : index
    %c0_140 = arith.constant 0 : index
    %447 = vector.load %arg4[%c4_139, %c0_140] : memref<27x256xf32, #tpu.memory_space<vmem>>, vector<1x256xf32>
    %448 = vector.shape_cast %447 : vector<1x256xf32> to vector<256xf32>
    %449 = vector.shape_cast %448 : vector<256xf32> to vector<1x1x256xf32>
    %450 = vector.broadcast %449 : vector<1x1x256xf32> to vector<1x4x256xf32>
    %451 = arith.mulf %360, %450 : vector<1x4x256xf32>
    %c13_141 = arith.constant 13 : index
    %c0_142 = arith.constant 0 : index
    %452 = vector.load %arg4[%c13_141, %c0_142] : memref<27x256xf32, #tpu.memory_space<vmem>>, vector<1x256xf32>
    %453 = vector.shape_cast %452 : vector<1x256xf32> to vector<256xf32>
    %454 = vector.shape_cast %453 : vector<256xf32> to vector<1x1x256xf32>
    %455 = vector.broadcast %454 : vector<1x1x256xf32> to vector<1x4x256xf32>
    %456 = arith.mulf %358, %455 : vector<1x4x256xf32>
    %457 = arith.addf %451, %456 : vector<1x4x256xf32>
    %c22_143 = arith.constant 22 : index
    %c0_144 = arith.constant 0 : index
    %458 = vector.load %arg4[%c22_143, %c0_144] : memref<27x256xf32, #tpu.memory_space<vmem>>, vector<1x256xf32>
    %459 = vector.shape_cast %458 : vector<1x256xf32> to vector<256xf32>
    %460 = vector.shape_cast %459 : vector<256xf32> to vector<1x1x256xf32>
    %461 = vector.broadcast %460 : vector<1x1x256xf32> to vector<1x4x256xf32>
    %462 = arith.mulf %362, %461 : vector<1x4x256xf32>
    %463 = arith.addf %457, %462 : vector<1x4x256xf32>
    %464 = arith.addf %446, %463 : vector<1x4x256xf32>
    %c255_i32_145 = arith.constant 255 : i32
    %465 = tpu.dynamic_rotate %360 by %c255_i32_145 dim 2 : vector<1x4x256xf32>, i32 -> vector<1x4x256xf32>
    %c255_i32_146 = arith.constant 255 : i32
    %466 = tpu.dynamic_rotate %358 by %c255_i32_146 dim 2 : vector<1x4x256xf32>, i32 -> vector<1x4x256xf32>
    %c255_i32_147 = arith.constant 255 : i32
    %467 = tpu.dynamic_rotate %362 by %c255_i32_147 dim 2 : vector<1x4x256xf32>, i32 -> vector<1x4x256xf32>
    %c5_148 = arith.constant 5 : index
    %c0_149 = arith.constant 0 : index
    %468 = vector.load %arg4[%c5_148, %c0_149] : memref<27x256xf32, #tpu.memory_space<vmem>>, vector<1x256xf32>
    %469 = vector.shape_cast %468 : vector<1x256xf32> to vector<256xf32>
    %470 = vector.shape_cast %469 : vector<256xf32> to vector<1x1x256xf32>
    %471 = vector.broadcast %470 : vector<1x1x256xf32> to vector<1x4x256xf32>
    %472 = arith.mulf %465, %471 : vector<1x4x256xf32>
    %c14_150 = arith.constant 14 : index
    %c0_151 = arith.constant 0 : index
    %473 = vector.load %arg4[%c14_150, %c0_151] : memref<27x256xf32, #tpu.memory_space<vmem>>, vector<1x256xf32>
    %474 = vector.shape_cast %473 : vector<1x256xf32> to vector<256xf32>
    %475 = vector.shape_cast %474 : vector<256xf32> to vector<1x1x256xf32>
    %476 = vector.broadcast %475 : vector<1x1x256xf32> to vector<1x4x256xf32>
    %477 = arith.mulf %466, %476 : vector<1x4x256xf32>
    %478 = arith.addf %472, %477 : vector<1x4x256xf32>
    %c23_152 = arith.constant 23 : index
    %c0_153 = arith.constant 0 : index
    %479 = vector.load %arg4[%c23_152, %c0_153] : memref<27x256xf32, #tpu.memory_space<vmem>>, vector<1x256xf32>
    %480 = vector.shape_cast %479 : vector<1x256xf32> to vector<256xf32>
    %481 = vector.shape_cast %480 : vector<256xf32> to vector<1x1x256xf32>
    %482 = vector.broadcast %481 : vector<1x1x256xf32> to vector<1x4x256xf32>
    %483 = arith.mulf %467, %482 : vector<1x4x256xf32>
    %484 = arith.addf %478, %483 : vector<1x4x256xf32>
    %485 = arith.addf %464, %484 : vector<1x4x256xf32>
    %c241_i32_154 = arith.constant 241 : i32
    %486 = tpu.dynamic_rotate %360 by %c241_i32_154 dim 2 : vector<1x4x256xf32>, i32 -> vector<1x4x256xf32>
    %c241_i32_155 = arith.constant 241 : i32
    %487 = tpu.dynamic_rotate %358 by %c241_i32_155 dim 2 : vector<1x4x256xf32>, i32 -> vector<1x4x256xf32>
    %c241_i32_156 = arith.constant 241 : i32
    %488 = tpu.dynamic_rotate %362 by %c241_i32_156 dim 2 : vector<1x4x256xf32>, i32 -> vector<1x4x256xf32>
    %c6_157 = arith.constant 6 : index
    %c0_158 = arith.constant 0 : index
    %489 = vector.load %arg4[%c6_157, %c0_158] : memref<27x256xf32, #tpu.memory_space<vmem>>, vector<1x256xf32>
    %490 = vector.shape_cast %489 : vector<1x256xf32> to vector<256xf32>
    %491 = vector.shape_cast %490 : vector<256xf32> to vector<1x1x256xf32>
    %492 = vector.broadcast %491 : vector<1x1x256xf32> to vector<1x4x256xf32>
    %493 = arith.mulf %486, %492 : vector<1x4x256xf32>
    %c15_159 = arith.constant 15 : index
    %c0_160 = arith.constant 0 : index
    %494 = vector.load %arg4[%c15_159, %c0_160] : memref<27x256xf32, #tpu.memory_space<vmem>>, vector<1x256xf32>
    %495 = vector.shape_cast %494 : vector<1x256xf32> to vector<256xf32>
    %496 = vector.shape_cast %495 : vector<256xf32> to vector<1x1x256xf32>
    %497 = vector.broadcast %496 : vector<1x1x256xf32> to vector<1x4x256xf32>
    %498 = arith.mulf %487, %497 : vector<1x4x256xf32>
    %499 = arith.addf %493, %498 : vector<1x4x256xf32>
    %c24_161 = arith.constant 24 : index
    %c0_162 = arith.constant 0 : index
    %500 = vector.load %arg4[%c24_161, %c0_162] : memref<27x256xf32, #tpu.memory_space<vmem>>, vector<1x256xf32>
    %501 = vector.shape_cast %500 : vector<1x256xf32> to vector<256xf32>
    %502 = vector.shape_cast %501 : vector<256xf32> to vector<1x1x256xf32>
    %503 = vector.broadcast %502 : vector<1x1x256xf32> to vector<1x4x256xf32>
    %504 = arith.mulf %488, %503 : vector<1x4x256xf32>
    %505 = arith.addf %499, %504 : vector<1x4x256xf32>
    %506 = arith.addf %485, %505 : vector<1x4x256xf32>
    %c240_i32_163 = arith.constant 240 : i32
    %507 = tpu.dynamic_rotate %360 by %c240_i32_163 dim 2 : vector<1x4x256xf32>, i32 -> vector<1x4x256xf32>
    %c240_i32_164 = arith.constant 240 : i32
    %508 = tpu.dynamic_rotate %358 by %c240_i32_164 dim 2 : vector<1x4x256xf32>, i32 -> vector<1x4x256xf32>
    %c240_i32_165 = arith.constant 240 : i32
    %509 = tpu.dynamic_rotate %362 by %c240_i32_165 dim 2 : vector<1x4x256xf32>, i32 -> vector<1x4x256xf32>
    %c7_166 = arith.constant 7 : index
    %c0_167 = arith.constant 0 : index
    %510 = vector.load %arg4[%c7_166, %c0_167] : memref<27x256xf32, #tpu.memory_space<vmem>>, vector<1x256xf32>
    %511 = vector.shape_cast %510 : vector<1x256xf32> to vector<256xf32>
    %512 = vector.shape_cast %511 : vector<256xf32> to vector<1x1x256xf32>
    %513 = vector.broadcast %512 : vector<1x1x256xf32> to vector<1x4x256xf32>
    %514 = arith.mulf %507, %513 : vector<1x4x256xf32>
    %c16_168 = arith.constant 16 : index
    %c0_169 = arith.constant 0 : index
    %515 = vector.load %arg4[%c16_168, %c0_169] : memref<27x256xf32, #tpu.memory_space<vmem>>, vector<1x256xf32>
    %516 = vector.shape_cast %515 : vector<1x256xf32> to vector<256xf32>
    %517 = vector.shape_cast %516 : vector<256xf32> to vector<1x1x256xf32>
    %518 = vector.broadcast %517 : vector<1x1x256xf32> to vector<1x4x256xf32>
    %519 = arith.mulf %508, %518 : vector<1x4x256xf32>
    %520 = arith.addf %514, %519 : vector<1x4x256xf32>
    %c25_170 = arith.constant 25 : index
    %c0_171 = arith.constant 0 : index
    %521 = vector.load %arg4[%c25_170, %c0_171] : memref<27x256xf32, #tpu.memory_space<vmem>>, vector<1x256xf32>
    %522 = vector.shape_cast %521 : vector<1x256xf32> to vector<256xf32>
    %523 = vector.shape_cast %522 : vector<256xf32> to vector<1x1x256xf32>
    %524 = vector.broadcast %523 : vector<1x1x256xf32> to vector<1x4x256xf32>
    %525 = arith.mulf %509, %524 : vector<1x4x256xf32>
    %526 = arith.addf %520, %525 : vector<1x4x256xf32>
    %527 = arith.addf %506, %526 : vector<1x4x256xf32>
    %c239_i32_172 = arith.constant 239 : i32
    %528 = tpu.dynamic_rotate %360 by %c239_i32_172 dim 2 : vector<1x4x256xf32>, i32 -> vector<1x4x256xf32>
    %c239_i32_173 = arith.constant 239 : i32
    %529 = tpu.dynamic_rotate %358 by %c239_i32_173 dim 2 : vector<1x4x256xf32>, i32 -> vector<1x4x256xf32>
    %c239_i32_174 = arith.constant 239 : i32
    %530 = tpu.dynamic_rotate %362 by %c239_i32_174 dim 2 : vector<1x4x256xf32>, i32 -> vector<1x4x256xf32>
    %c8_175 = arith.constant 8 : index
    %c0_176 = arith.constant 0 : index
    %531 = vector.load %arg4[%c8_175, %c0_176] : memref<27x256xf32, #tpu.memory_space<vmem>>, vector<1x256xf32>
    %532 = vector.shape_cast %531 : vector<1x256xf32> to vector<256xf32>
    %533 = vector.shape_cast %532 : vector<256xf32> to vector<1x1x256xf32>
    %534 = vector.broadcast %533 : vector<1x1x256xf32> to vector<1x4x256xf32>
    %535 = arith.mulf %528, %534 : vector<1x4x256xf32>
    %c17_177 = arith.constant 17 : index
    %c0_178 = arith.constant 0 : index
    %536 = vector.load %arg4[%c17_177, %c0_178] : memref<27x256xf32, #tpu.memory_space<vmem>>, vector<1x256xf32>
    %537 = vector.shape_cast %536 : vector<1x256xf32> to vector<256xf32>
    %538 = vector.shape_cast %537 : vector<256xf32> to vector<1x1x256xf32>
    %539 = vector.broadcast %538 : vector<1x1x256xf32> to vector<1x4x256xf32>
    %540 = arith.mulf %529, %539 : vector<1x4x256xf32>
    %541 = arith.addf %535, %540 : vector<1x4x256xf32>
    %c26_179 = arith.constant 26 : index
    %c0_180 = arith.constant 0 : index
    %542 = vector.load %arg4[%c26_179, %c0_180] : memref<27x256xf32, #tpu.memory_space<vmem>>, vector<1x256xf32>
    %543 = vector.shape_cast %542 : vector<1x256xf32> to vector<256xf32>
    %544 = vector.shape_cast %543 : vector<256xf32> to vector<1x1x256xf32>
    %545 = vector.broadcast %544 : vector<1x1x256xf32> to vector<1x4x256xf32>
    %546 = arith.mulf %530, %545 : vector<1x4x256xf32>
    %547 = arith.addf %541, %546 : vector<1x4x256xf32>
    %548 = arith.addf %527, %547 : vector<1x4x256xf32>
    %c1_181 = arith.constant 1 : index
    %c0_182 = arith.constant 0 : index
    %549 = vector.load %arg5[%c1_181, %c0_182] : memref<2x256xf32, #tpu.memory_space<vmem>>, vector<1x256xf32>
    %550 = vector.shape_cast %549 : vector<1x256xf32> to vector<256xf32>
    %551 = vector.shape_cast %550 : vector<256xf32> to vector<1x1x256xf32>
    %552 = vector.broadcast %551 : vector<1x1x256xf32> to vector<1x4x256xf32>
    %553 = arith.addf %548, %552 : vector<1x4x256xf32>
    %cst_183 = arith.constant 0.000000e+00 : f32
    %554 = vector.broadcast %cst_183 : f32 to vector<1x4x256xf32>
    %555 = arith.maximumf %553, %554 : vector<1x4x256xf32>
    %c0_184 = arith.constant 0 : index
    %556 = memref.load %arg6[%c0_184] : memref<4xf32, #tpu.memory_space<smem>>
    %557 = vector.broadcast %556 : f32 to vector<1x4x256xf32>
    %558 = arith.mulf %557, %0 : vector<1x4x256xf32>
    %c1_185 = arith.constant 1 : index
    %559 = memref.load %arg6[%c1_185] : memref<4xf32, #tpu.memory_space<smem>>
    %560 = vector.broadcast %559 : f32 to vector<1x4x256xf32>
    %561 = arith.mulf %560, %358 : vector<1x4x256xf32>
    %562 = arith.addf %558, %561 : vector<1x4x256xf32>
    %c2_186 = arith.constant 2 : index
    %563 = memref.load %arg6[%c2_186] : memref<4xf32, #tpu.memory_space<smem>>
    %564 = vector.broadcast %563 : f32 to vector<1x4x256xf32>
    %565 = arith.mulf %564, %555 : vector<1x4x256xf32>
    %566 = arith.addf %562, %565 : vector<1x4x256xf32>
    %c3_187 = arith.constant 3 : index
    %567 = memref.load %arg6[%c3_187] : memref<4xf32, #tpu.memory_space<smem>>
    %568 = vector.broadcast %567 : f32 to vector<1x4x256xf32>
    %569 = arith.addf %566, %568 : vector<1x4x256xf32>
    %c0_188 = arith.constant 0 : index
    %c0_189 = arith.constant 0 : index
    %c0_190 = arith.constant 0 : index
    %570 = vector.load %arg7[%c0_188, %c0_189, %c0_190] : memref<1x4x256xf32, #tpu.memory_space<vmem>>, vector<1x4x256xf32>
    tpu.vector_store %arg7[%c0_188, %c0_189, %c0_190], %569 {strides = array<i32>} : memref<1x4x256xf32, #tpu.memory_space<vmem>>, vector<1x4x256xf32>,
    return
  }
  func.func @transform_0(%arg0: i32) -> (i32, i32, i32) {
    %c0_i32 = arith.constant 0 : i32
    %c0_i32_0 = arith.constant 0 : i32
    %c0_i32_1 = arith.constant 0 : i32
    return %arg0, %c0_i32, %c0_i32_0 : i32, i32, i32
  }
  func.func @transform_1(%arg0: i32) -> (i32, i32) {
    %c0_i32 = arith.constant 0 : i32
    %c0_i32_0 = arith.constant 0 : i32
    %c0_i32_1 = arith.constant 0 : i32
    return %c0_i32, %c0_i32_0 : i32, i32
  }
  func.func @transform_2(%arg0: i32) -> (i32, i32) {
    %c0_i32 = arith.constant 0 : i32
    %c0_i32_0 = arith.constant 0 : i32
    %c0_i32_1 = arith.constant 0 : i32
    return %c0_i32, %c0_i32_0 : i32, i32
  }
  func.func @transform_3(%arg0: i32) -> (i32, i32) {
    %c0_i32 = arith.constant 0 : i32
    %c0_i32_0 = arith.constant 0 : i32
    %c0_i32_1 = arith.constant 0 : i32
    return %c0_i32, %c0_i32_0 : i32, i32
  }
  func.func @transform_4(%arg0: i32) -> (i32, i32) {
    %c0_i32 = arith.constant 0 : i32
    %c0_i32_0 = arith.constant 0 : i32
    %c0_i32_1 = arith.constant 0 : i32
    return %c0_i32, %c0_i32_0 : i32, i32
  }
  func.func @transform_5(%arg0: i32) -> i32 {
    %c0_i32 = arith.constant 0 : i32
    %c0_i32_0 = arith.constant 0 : i32
    return %c0_i32 : i32
  }
  func.func @transform_6(%arg0: i32) -> (i32, i32, i32) {
    %c0_i32 = arith.constant 0 : i32
    %c0_i32_0 = arith.constant 0 : i32
    %c0_i32_1 = arith.constant 0 : i32
    return %arg0, %c0_i32, %c0_i32_0 : i32, i32, i32
  }
}

</mosaic_0001>

<llo_original>
// kernel: scrb_forward.1
$region0: #{scrb_forward.1}
  #allocation0 [shape = 'u32[]', space=smem, size = 0x4, offset = 0x4, fixed_abs, tag = 'smem constant byte address 0x4 - core index']
  #allocation1 [shape = 'u32[144,128]{1,0:T(1,128)}', space=vmem, size = 0x12000, scoped, tag = 'internal scratch']
  %s0 = inlined_call_operand.vmem [shape: f32[2,4,256], index: 0, kind: input, shape index: {}]
  %s1 = inlined_call_operand.vmem [shape: f32[27,256], index: 1, kind: input, shape index: {}]
  %s2 = inlined_call_operand.vmem [shape: f32[27,256], index: 2, kind: input, shape index: {}]
  %s3 = inlined_call_operand.vmem [shape: f32[27,256], index: 3, kind: input, shape index: {}]
  %s4 = inlined_call_operand.vmem [shape: f32[2,256], index: 4, kind: input, shape index: {}]
  %s5 = inlined_call_operand.vmem [shape: f32[4], index: 5, kind: input, shape index: {}]
  %s6 = inlined_call_operand.vmem [shape: f32[2,4,256], index: 6, kind: output, shape index: {}]
  %s7 = sld [smem:[#allocation0]]
  $region61: #{scrb_forward.1} parent=0
    _
  %s9 = ssub.s32 1, %s7
  %s10 = scalar_select 0, %s9, %s7
  $region1: #{scrb_forward.1} parent=0
    #allocation2 [shape = 'u8[512]{0}', space=smem, size = 0x200, scoped, tag = 'input window, operand 5, single buffered']
    #allocation3 [shape = 's32[2]{0}', space=sflag, size = 0x8, scoped, tag = 'scoped memory for scrb_forward.1']
    %11 = vsyncpa [#allocation3], 0
    loop: start=0, step=1, limit=4
    $region2: #{scrb_forward.1} parent=1 // loop_pre_header
      _
    $region3: #{scrb_forward.1} parent=1 // loop_header
      %s13 = sphi 0, %s17
      %p14 = scmp.ge.s32.totalorder %s13, 4
      %s23 = sphi 0, %s25
      %s26 = sphi 0, %s23
      %s27 = sphi 0, %s26
      %s43 = sphi 0, %s27
      %s47 = sphi 0, %s47
      %s49 = sphi 0, %s47
      %s50 = sphi 0, %s49
      %s64 = sphi 0, %s50
      %s68 = sphi 0, %s68
      %s70 = sphi 0, %s68
      %s71 = sphi 0, %s70
      %s85 = sphi 0, %s71
      %s89 = sphi 0, %s89
      %s91 = sphi 0, %s89
      %s92 = sphi 0, %s91
      %s106 = sphi 0, %s92
      %s110 = sphi 0, %s110
      %s112 = sphi 0, %s110
      %s113 = sphi 0, %s112
      %s127 = sphi 0, %s113
      %s131 = sphi 0, %s131
      %s133 = sphi 0, %s131
      %s134 = sphi 0, %s133
      %s148 = sphi 0, %s134
      %s154 = sphi 0, %s156
      %s157 = sphi 0, %s154
      %s158 = sphi 0, %s157
      %s174 = sphi 0, %s158
    $region4: #{scrb_forward.1} parent=1 // loop_header_branch
      %16 = sbr.rel (%p14) target = $region8
    $region5: #{scrb_forward.1} parent=1 // loop_body
      %s18 = ssub.s32 %s13, 1
      %s19 = ssub.s32 %s13, 2
      %s20 = sadd.s32 %s13, 1
      %s21 = ssub.s32 %s13, %s20
      %p22 = scmp.eq.s32.totalorder %s21, 0
      %s24 = sadd.s32 %s23, 1
      %s25 = scalar_select %p22, %s23, %s24
      %p28 = pneg %p22
      %p29 = scmp.eq.s32.totalorder %s13, 1
      %p30 = por %p28, %p29
      %p31 = scmp.ne.s32.totalorder %s23, %s26
      %p32 = scmp.eq.s32.totalorder %s13, 0
      %p33 = por %p31, %p32
      %p34 = scmp.ne.s32.totalorder %s23, %s26
      %p35 = scmp.eq.s32.totalorder %s18, 1
      %p36 = por %p34, %p35
      %p37 = scmp.ne.s32.totalorder %s26, %s27
      %p38 = scmp.eq.s32.totalorder %s18, 0
      %p39 = por %p37, %p38
      %p40 = scmp.ne.s32.totalorder %s26, %s27
      %p41 = scmp.eq.s32.totalorder %s19, 1
      %p42 = por %p40, %p41
      %p44 = scmp.ne.s32.totalorder %s27, %s43
      %p45 = scmp.eq.s32.totalorder %s19, 0
      %p46 = por %p44, %p45
      %s48 = sadd.s32 %s47, 1
      %p51 = scmp.eq.s32.totalorder %s13, 1
      %p52 = scmp.ne.s32.totalorder %s47, %s49
      %p53 = scmp.eq.s32.totalorder %s13, 0
      %p54 = por %p52, %p53
      %p55 = scmp.ne.s32.totalorder %s47, %s49
      %p56 = scmp.eq.s32.totalorder %s18, 1
      %p57 = por %p55, %p56
      %p58 = scmp.ne.s32.totalorder %s49, %s50
      %p59 = scmp.eq.s32.totalorder %s18, 0
      %p60 = por %p58, %p59
      %p61 = scmp.ne.s32.totalorder %s49, %s50
      %p62 = scmp.eq.s32.totalorder %s19, 1
      %p63 = por %p61, %p62
      %p65 = scmp.ne.s32.totalorder %s50, %s64
      %p66 = scmp.eq.s32.totalorder %s19, 0
      %p67 = por %p65, %p66
      %s69 = sadd.s32 %s68, 1
      %p72 = scmp.eq.s32.totalorder %s13, 1
      %p73 = scmp.ne.s32.totalorder %s68, %s70
      %p74 = scmp.eq.s32.totalorder %s13, 0
      %p75 = por %p73, %p74
      %p76 = scmp.ne.s32.totalorder %s68, %s70
      %p77 = scmp.eq.s32.totalorder %s18, 1
      %p78 = por %p76, %p77
      %p79 = scmp.ne.s32.totalorder %s70, %s71
      %p80 = scmp.eq.s32.totalorder %s18, 0
      %p81 = por %p79, %p80
      %p82 = scmp.ne.s32.totalorder %s70, %s71
      %p83 = scmp.eq.s32.totalorder %s19, 1
      %p84 = por %p82, %p83
      %p86 = scmp.ne.s32.totalorder %s71, %s85
      %p87 = scmp.eq.s32.totalorder %s19, 0
      %p88 = por %p86, %p87
      %s90 = sadd.s32 %s89, 1
      %p93 = scmp.eq.s32.totalorder %s13, 1
      %p94 = scmp.ne.s32.totalorder %s89, %s91
      %p95 = scmp.eq.s32.totalorder %s13, 0
      %p96 = por %p94, %p95
      %p97 = scmp.ne.s32.totalorder %s89, %s91
      %p98 = scmp.eq.s32.totalorder %s18, 1
      %p99 = por %p97, %p98
      %p100 = scmp.ne.s32.totalorder %s91, %s92
      %p101 = scmp.eq.s32.totalorder %s18, 0
      %p102 = por %p100, %p101
      %p103 = scmp.ne.s32.totalorder %s91, %s92
      %p104 = scmp.eq.s32.totalorder %s19, 1
      %p105 = por %p103, %p104
      %p107 = scmp.ne.s32.totalorder %s92, %s106
      %p108 = scmp.eq.s32.totalorder %s19, 0
      %p109 = por %p107, %p108
      %s111 = sadd.s32 %s110, 1
      %p114 = scmp.eq.s32.totalorder %s13, 1
      %p115 = scmp.ne.s32.totalorder %s110, %s112
      %p116 = scmp.eq.s32.totalorder %s13, 0
      %p117 = por %p115, %p116
      %p118 = scmp.ne.s32.totalorder %s110, %s112
      %p119 = scmp.eq.s32.totalorder %s18, 1
      %p120 = por %p118, %p119
      %p121 = scmp.ne.s32.totalorder %s112, %s113
      %p122 = scmp.eq.s32.totalorder %s18, 0
      %p123 = por %p121, %p122
      %p124 = scmp.ne.s32.totalorder %s112, %s113
      %p125 = scmp.eq.s32.totalorder %s19, 1
      %p126 = por %p124, %p125
      %p128 = scmp.ne.s32.totalorder %s113, %s127
      %p129 = scmp.eq.s32.totalorder %s19, 0
      %p130 = por %p128, %p129
      %s132 = sadd.s32 %s131, 1
      %p135 = scmp.eq.s32.totalorder %s13, 1
      %p136 = scmp.ne.s32.totalorder %s131, %s133
      %p137 = scmp.eq.s32.totalorder %s13, 0
      %p138 = por %p136, %p137
      %p139 = scmp.ne.s32.totalorder %s131, %s133
      %p140 = scmp.eq.s32.totalorder %s18, 1
      %p141 = por %p139, %p140
      %p142 = scmp.ne.s32.totalorder %s133, %s134
      %p143 = scmp.eq.s32.totalorder %s18, 0
      %p144 = por %p142, %p143
      %p145 = scmp.ne.s32.totalorder %s133, %s134
      %p146 = scmp.eq.s32.totalorder %s19, 1
      %p147 = por %p145, %p146
      %p149 = scmp.ne.s32.totalorder %s134, %s148
      %p150 = scmp.eq.s32.totalorder %s19, 0
      %p151 = por %p149, %p150
      %s152 = ssub.s32 %s13, %s20
      %p153 = scmp.eq.s32.totalorder %s152, 0
      %s155 = sadd.s32 %s154, 1
      %s156 = scalar_select %p153, %s154, %s155
      %p159 = pneg %p153
      %p160 = scmp.eq.s32.totalorder %s13, 1
      %p161 = por %p159, %p160
      %p162 = scmp.ne.s32.totalorder %s154, %s157
      %p163 = scmp.eq.s32.totalorder %s13, 0
      %p164 = por %p162, %p163
      %p165 = scmp.ne.s32.totalorder %s154, %s157
      %p166 = scmp.eq.s32.totalorder %s18, 1
      %p167 = por %p165, %p166
      %p168 = scmp.ne.s32.totalorder %s157, %s158
      %p169 = scmp.eq.s32.totalorder %s18, 0
      %p170 = por %p168, %p169
      %p171 = scmp.ne.s32.totalorder %s157, %s158
      %p172 = scmp.eq.s32.totalorder %s19, 1
      %p173 = por %p171, %p172
      %p175 = scmp.ne.s32.totalorder %s158, %s174
      %p176 = scmp.eq.s32.totalorder %s19, 0
      %p177 = por %p175, %p176
      %p178 = scmp.le.s32.totalorder 1, %s13
      %p179 = scmp.lt.s32.totalorder %s13, 3
      %p180 = pnand %p178, %p179
      %p181 = pneg %p180
      // Predicated region
      $region9: #{scrb_forward.1} parent=5 // pred_check
        _
      $region10: #{scrb_forward.1} parent=5 // pred_check_branch
        %183 = sbr.rel (%p180) target = $region12
      $region11: #{scrb_forward.1} parent=5 // pred_region
        %s184 = ssub.s32 %s13, 1
        // Predicated region
        $region13: #{scrb_forward.1} parent=11 // pred_check
          %p185 = pneg %p60
        $region14: #{scrb_forward.1} parent=11 // pred_check_branch
          %187 = sbr.rel (%p185) target = $region16
        $region15: #{scrb_forward.1} parent=11 // pred_region
          _
        $region16: #{scrb_forward.1} parent=11 // pred_fallthru
          _
        // Predicated region
        $region17: #{scrb_forward.1} parent=11 // pred_check
          %p188 = pneg %p81
        $region18: #{scrb_forward.1} parent=11 // pred_check_branch
          %190 = sbr.rel (%p188) target = $region20
        $region19: #{scrb_forward.1} parent=11 // pred_region
          _
        $region20: #{scrb_forward.1} parent=11 // pred_fallthru
          _
        // Predicated region
        $region21: #{scrb_forward.1} parent=11 // pred_check
          %p191 = pneg %p102
        $region22: #{scrb_forward.1} parent=11 // pred_check_branch
          %193 = sbr.rel (%p191) target = $region24
        $region23: #{scrb_forward.1} parent=11 // pred_region
          _
        $region24: #{scrb_forward.1} parent=11 // pred_fallthru
          _
        // Predicated region
        $region25: #{scrb_forward.1} parent=11 // pred_check
          %p194 = pneg %p123
        $region26: #{scrb_forward.1} parent=11 // pred_check_branch
          %196 = sbr.rel (%p194) target = $region28
        $region27: #{scrb_forward.1} parent=11 // pred_region
          _
        $region28: #{scrb_forward.1} parent=11 // pred_fallthru
          _
        // Predicated region
        $region29: #{scrb_forward.1} parent=11 // pred_check
          %p197 = pneg %p144
        $region30: #{scrb_forward.1} parent=11 // pred_check_branch
          %199 = sbr.rel (%p197) target = $region32
        $region31: #{scrb_forward.1} parent=11 // pred_region
          %s201 = ssub.s32 16, 16
          %202 = vsyncadd [#allocation3], %s201
          %s204 = sshll.u32 %s5, 4
          %s205 = int_to_ptr.vmem [resolvable:$true] %s204
          %207 = dma.vmem_to_smem %s205, 16, [#allocation2], [#allocation3]
        $region32: #{scrb_forward.1} parent=11 // pred_fallthru
          _
      $region12: #{scrb_forward.1} parent=5 // pred_fallthru
        _
      %p208 = scmp.lt.s32.totalorder %s13, 2
      // Predicated region
      $region33: #{scrb_forward.1} parent=5 // pred_check
        %p209 = pneg %p208
      $region34: #{scrb_forward.1} parent=5 // pred_check_branch
        %211 = sbr.rel (%p209) target = $region36
      $region35: #{scrb_forward.1} parent=5 // pred_region
        // Predicated region
        $region37: #{scrb_forward.1} parent=35 // pred_check
          %p212 = pneg %p33
        $region38: #{scrb_forward.1} parent=35 // pred_check_branch
          %214 = sbr.rel (%p212) target = $region40
        $region39: #{scrb_forward.1} parent=35 // pred_region
          %p215 = scmp.lt.s32.totalorder %s13, 1
          %s216 = scalar_select %p215, %s13, 1
          %s217 = smul.addr %s216, 2
          %s218 = smul.addr %s217, 4
          %s219 = scalar_lea.vmem %s0, %s218
        $region40: #{scrb_forward.1} parent=35 // pred_fallthru
          _
      $region36: #{scrb_forward.1} parent=5 // pred_fallthru
        _
      %p220 = scmp.le.s32.totalorder 1, %s13
      %p221 = scmp.lt.s32.totalorder %s13, 3
      %p222 = pnand %p220, %p221
      %p223 = pneg %p222
      // Predicated region
      $region41: #{scrb_forward.1} parent=5 // pred_check
        _
      $region42: #{scrb_forward.1} parent=5 // pred_check_branch
        %225 = sbr.rel (%p222) target = $region44
      $region43: #{scrb_forward.1} parent=5 // pred_region
        %s226 = ssub.s32 %s13, 1
        // Predicated region
        $region45: #{scrb_forward.1} parent=43 // pred_check
          %p227 = pneg %p144
        $region46: #{scrb_forward.1} parent=43 // pred_check_branch
          %229 = sbr.rel (%p227) target = $region48
        $region47: #{scrb_forward.1} parent=43 // pred_region
          %230 = dma.done [#allocation3], 16
        $region48: #{scrb_forward.1} parent=43 // pred_fallthru
          _
        %231 = sfence
        %p232 = scmp.lt.s32.totalorder %s18, 1
        %s233 = scalar_select %p232, %s18, 1
        %s234 = smul.addr %s233, 2
        %s235 = smul.addr %s234, 4
        %s236 = scalar_lea.vmem %s0, %s235
        %p237 = pneg %p39
        %p238 = pneg %p36
        %p239 = pneg %p60
        %p240 = pneg %p57
        %p241 = pneg %p81
        %p242 = pneg %p78
        %p243 = pneg %p102
        %p244 = pneg %p99
        %p245 = pneg %p123
        %p246 = pneg %p120
        %p247 = pneg %p144
        %p248 = pneg %p141
        %p249 = pneg %p170
        %p250 = pneg %p167
        %p251 = scmp.lt.s32.totalorder %s18, 1
        %s252 = scalar_select %p251, %s18, 1
        %s253 = smul.addr %s252, 2
        %s254 = smul.addr %s253, 4
        %s255 = scalar_lea.vmem %s6, %s254
        %p256 = scmp.lt.s32.totalorder %s18, 1
        %s257 = scalar_select %p256, %s18, 1
        %s258 = smul.addr %s257, 2
        %s259 = smul.addr %s258, 4
        %s260 = scalar_lea.vmem %s0, %s259
        %p261 = scmp.lt.s32.totalorder %s18, 1
        %s262 = scalar_select %p261, %s18, 1
        %s263 = smul.addr %s262, 2
        %s264 = smul.addr %s263, 4
        %s265 = scalar_lea.vmem %s6, %s264
        %v266 = vld [vmem:[%s260] sm:$0xff]
        %v268 = vcombine.high %v266, %v266
        %v269 = vrot.slane %v266, 7
        %v270 = vrot.slane %v268, 7
        %vm273 = vcmask 1040384
        %v274 = vsel %vm273, 0.0, %v269
        %v275 = vsel %vm273, 0.0, %v270
        %v276 = vrot.slane %v266, 1
        %v277 = vrot.slane %v268, 1
        %vm280 = vcmask 1042432
        %v281 = vsel %vm280, %v276, 0.0
        %v282 = vsel %vm280, %v277, 0.0
        %283 = vrot.lane.b32.xlu0 %v274, 17
        %v284 = vpop.permute.xlu0 %283
        %285 = vrot.lane.b32.xlu0 %v275, 17
        %v286 = vpop.permute.xlu0 %285
        %v287 = vlaneseq
        %v288 = vand.u32 %v287, 127
        %vm289 = vcmp.lt.s32.totalorder %v288, 17
        %v290 = vsel %vm289, %v284, %v286
        %v291 = vsel %vm289, %v286, %v284
        %293 = vrot.lane.b32.xlu0 %v266, 17
        %v294 = vpop.permute.xlu0 %293
        %295 = vrot.lane.b32.xlu0 %v268, 17
        %v296 = vpop.permute.xlu0 %295
        %v297 = vsel %vm289, %v294, %v296
        %v298 = vsel %vm289, %v296, %v294
        %299 = vrot.lane.b32.xlu0 %v281, 17
        %v300 = vpop.permute.xlu0 %299
        %301 = vrot.lane.b32.xlu0 %v282, 17
        %v302 = vpop.permute.xlu0 %301
        %v303 = vsel %vm289, %v300, %v302
        %v304 = vsel %vm289, %v302, %v300
        %v305 = vld [vmem:[%s1] ss:$8 sm:$0x3]
        %v307 = vlaneseq
        %v308 = vshrl.u32 %v307, 7
        %v309 = vsub.s32 0, %v308
        %v310 = vrot.slane %v305, %v309
        %v311 = vlaneseq
        %v312 = vshrl.u32 %v311, 7
        %v313 = vsub.s32 1, %v312
        %v314 = vrot.slane %v305, %v313
        %v317 = vmul.f32 %v291, %v310
        %v318 = vmul.f32 %v290, %v314
        %s319 = scalar_lea.vmem %s1, 17
        %v320 = vld [vmem:[%s319] ss:$8 sm:$0x3]
        %v322 = vlaneseq
        %v323 = vshrl.u32 %v322, 7
        %v324 = vsub.s32 0, %v323
        %v325 = vrot.slane %v320, %v324
        %v326 = vlaneseq
        %v327 = vshrl.u32 %v326, 7
        %v328 = vsub.s32 1, %v327
        %v329 = vrot.slane %v320, %v328
        %v332 = vmul.f32 %v298, %v325
        %v333 = vmul.f32 %v297, %v329
        %v334 = vadd.f32 %v317, %v332
        %v335 = vadd.f32 %v318, %v333
        %s336 = scalar_lea.vmem %s1, 34
        %v337 = vld [vmem:[%s336] ss:$8 sm:$0x3]
        %v339 = vlaneseq
        %v340 = vshrl.u32 %v339, 7
        %v341 = vsub.s32 0, %v340
        %v342 = vrot.slane %v337, %v341
        %v343 = vlaneseq
        %v344 = vshrl.u32 %v343, 7
        %v345 = vsub.s32 1, %v344
        %v346 = vrot.slane %v337, %v345
        %v349 = vmul.f32 %v304, %v342
        %v350 = vmul.f32 %v303, %v346
        %v351 = vadd.f32 %v334, %v349
        %v352 = vadd.f32 %v335, %v350
        %v353 = vld [vmem:[%s2] ss:$8 sm:$0x3]
        %v355 = vlaneseq
        %v356 = vshrl.u32 %v355, 7
        %v357 = vsub.s32 0, %v356
        %v358 = vrot.slane %v353, %v357
        %v359 = vlaneseq
        %v360 = vshrl.u32 %v359, 7
        %v361 = vsub.s32 1, %v360
        %v362 = vrot.slane %v353, %v361
        %v365 = vmul.f32 %v291, %v358
        %v366 = vmul.f32 %v290, %v362
        %s367 = scalar_lea.vmem %s2, 17
        %v368 = vld [vmem:[%s367] ss:$8 sm:$0x3]
        %v370 = vlaneseq
        %v371 = vshrl.u32 %v370, 7
        %v372 = vsub.s32 0, %v371
        %v373 = vrot.slane %v368, %v372
        %v374 = vlaneseq
        %v375 = vshrl.u32 %v374, 7
        %v376 = vsub.s32 1, %v375
        %v377 = vrot.slane %v368, %v376
        %v380 = vmul.f32 %v298, %v373
        %v381 = vmul.f32 %v297, %v377
        %v382 = vadd.f32 %v365, %v380
        %v383 = vadd.f32 %v366, %v381
        %s384 = scalar_lea.vmem %s2, 34
        %v385 = vld [vmem:[%s384] ss:$8 sm:$0x3]
        %v387 = vlaneseq
        %v388 = vshrl.u32 %v387, 7
        %v389 = vsub.s32 0, %v388
        %v390 = vrot.slane %v385, %v389
        %v391 = vlaneseq
        %v392 = vshrl.u32 %v391, 7
        %v393 = vsub.s32 1, %v392
        %v394 = vrot.slane %v385, %v393
        %v397 = vmul.f32 %v304, %v390
        %v398 = vmul.f32 %v303, %v394
        %v399 = vadd.f32 %v382, %v397
        %v400 = vadd.f32 %v383, %v398
        %401 = vrot.lane.b32.xlu0 %v274, 16
        %v402 = vpop.permute.xlu0 %401
        %403 = vrot.lane.b32.xlu0 %v275, 16
        %v404 = vpop.permute.xlu0 %403
        %vm405 = vcmp.lt.s32.totalorder %v288, 16
        %v406 = vsel %vm405, %v402, %v404
        %v407 = vsel %vm405, %v404, %v402
        %408 = vrot.lane.b32.xlu0 %v266, 16
        %v409 = vpop.permute.xlu0 %408
        %410 = vrot.lane.b32.xlu0 %v268, 16
        %v411 = vpop.permute.xlu0 %410
        %v412 = vsel %vm405, %v409, %v411
        %v413 = vsel %vm405, %v411, %v409
        %414 = vrot.lane.b32.xlu0 %v281, 16
        %v415 = vpop.permute.xlu0 %414
        %416 = vrot.lane.b32.xlu0 %v282, 16
        %v417 = vpop.permute.xlu0 %416
        %v418 = vsel %vm405, %v415, %v417
        %v419 = vsel %vm405, %v417, %v415
        %s420 = scalar_lea.vmem %s1, 1
        %v421 = vld [vmem:[%s420] ss:$8 sm:$0x3]
        %v423 = vlaneseq
        %v424 = vshrl.u32 %v423, 7
        %v425 = vsub.s32 0, %v424
        %v426 = vrot.slane %v421, %v425
        %v427 = vlaneseq
        %v428 = vshrl.u32 %v427, 7
        %v429 = vsub.s32 1, %v428
        %v430 = vrot.slane %v421, %v429
        %v433 = vmul.f32 %v407, %v426
        %v434 = vmul.f32 %v406, %v430
        %s435 = scalar_lea.vmem %s1, 18
        %v436 = vld [vmem:[%s435] ss:$8 sm:$0x3]
        %v438 = vlaneseq
        %v439 = vshrl.u32 %v438, 7
        %v440 = vsub.s32 0, %v439
        %v441 = vrot.slane %v436, %v440
        %v442 = vlaneseq
        %v443 = vshrl.u32 %v442, 7
        %v444 = vsub.s32 1, %v443
        %v445 = vrot.slane %v436, %v444
        %v448 = vmul.f32 %v413, %v441
        %v449 = vmul.f32 %v412, %v445
        %v450 = vadd.f32 %v433, %v448
        %v451 = vadd.f32 %v434, %v449
        %s452 = scalar_lea.vmem %s1, 35
        %v453 = vld [vmem:[%s452] ss:$8 sm:$0x3]
        %v455 = vlaneseq
        %v456 = vshrl.u32 %v455, 7
        %v457 = vsub.s32 0, %v456
        %v458 = vrot.slane %v453, %v457
        %v459 = vlaneseq
        %v460 = vshrl.u32 %v459, 7
        %v461 = vsub.s32 1, %v460
        %v462 = vrot.slane %v453, %v461
        %v465 = vmul.f32 %v419, %v458
        %v466 = vmul.f32 %v418, %v462
        %v467 = vadd.f32 %v450, %v465
        %v468 = vadd.f32 %v451, %v466
        %v469 = vadd.f32 %v351, %v467
        %v470 = vadd.f32 %v352, %v468
        %s471 = scalar_lea.vmem %s2, 1
        %v472 = vld [vmem:[%s471] ss:$8 sm:$0x3]
        %v474 = vlaneseq
        %v475 = vshrl.u32 %v474, 7
        %v476 = vsub.s32 0, %v475
        %v477 = vrot.slane %v472, %v476
        %v478 = vlaneseq
        %v479 = vshrl.u32 %v478, 7
        %v480 = vsub.s32 1, %v479
        %v481 = vrot.slane %v472, %v480
        %v484 = vmul.f32 %v407, %v477
        %v485 = vmul.f32 %v406, %v481
        %s486 = scalar_lea.vmem %s2, 18
        %v487 = vld [vmem:[%s486] ss:$8 sm:$0x3]
        %v489 = vlaneseq
        %v490 = vshrl.u32 %v489, 7
        %v491 = vsub.s32 0, %v490
        %v492 = vrot.slane %v487, %v491
        %v493 = vlaneseq
        %v494 = vshrl.u32 %v493, 7
        %v495 = vsub.s32 1, %v494
        %v496 = vrot.slane %v487, %v495
        %v499 = vmul.f32 %v413, %v492
        %v500 = vmul.f32 %v412, %v496
        %v501 = vadd.f32 %v484, %v499
        %v502 = vadd.f32 %v485, %v500
        %s503 = scalar_lea.vmem %s2, 35
        %v504 = vld [vmem:[%s503] ss:$8 sm:$0x3]
        %v506 = vlaneseq
        %v507 = vshrl.u32 %v506, 7
        %v508 = vsub.s32 0, %v507
        %v509 = vrot.slane %v504, %v508
        %v510 = vlaneseq
        %v511 = vshrl.u32 %v510, 7
        %v512 = vsub.s32 1, %v511
        %v513 = vrot.slane %v504, %v512
        %v516 = vmul.f32 %v419, %v509
        %v517 = vmul.f32 %v418, %v513
        %v518 = vadd.f32 %v501, %v516
        %v519 = vadd.f32 %v502, %v517
        %v520 = vadd.f32 %v399, %v518
        %v521 = vadd.f32 %v400, %v519
        %522 = vrot.lane.b32.xlu0 %v274, 15
        %v523 = vpop.permute.xlu0 %522
        %524 = vrot.lane.b32.xlu0 %v275, 15
        %v525 = vpop.permute.xlu0 %524
        %vm526 = vcmp.lt.s32.totalorder %v288, 15
        %v527 = vsel %vm526, %v523, %v525
        %v528 = vsel %vm526, %v525, %v523
        %529 = vrot.lane.b32.xlu0 %v266, 15
        %v530 = vpop.permute.xlu0 %529
        %531 = vrot.lane.b32.xlu0 %v268, 15
        %v532 = vpop.permute.xlu0 %531
        %v533 = vsel %vm526, %v530, %v532
        %v534 = vsel %vm526, %v532, %v530
        %535 = vrot.lane.b32.xlu0 %v281, 15
        %v536 = vpop.permute.xlu0 %535
        %537 = vrot.lane.b32.xlu0 %v282, 15
        %v538 = vpop.permute.xlu0 %537
        %v539 = vsel %vm526, %v536, %v538
        %v540 = vsel %vm526, %v538, %v536
        %s541 = scalar_lea.vmem %s1, 2
        %v542 = vld [vmem:[%s541] ss:$8 sm:$0x3]
        %v544 = vlaneseq
        %v545 = vshrl.u32 %v544, 7
        %v546 = vsub.s32 0, %v545
        %v547 = vrot.slane %v542, %v546
        %v548 = vlaneseq
        %v549 = vshrl.u32 %v548, 7
        %v550 = vsub.s32 1, %v549
        %v551 = vrot.slane %v542, %v550
        %v554 = vmul.f32 %v528, %v547
        %v555 = vmul.f32 %v527, %v551
        %s556 = scalar_lea.vmem %s1, 19
        %v557 = vld [vmem:[%s556] ss:$8 sm:$0x3]
        %v559 = vlaneseq
        %v560 = vshrl.u32 %v559, 7
        %v561 = vsub.s32 0, %v560
        %v562 = vrot.slane %v557, %v561
        %v563 = vlaneseq
        %v564 = vshrl.u32 %v563, 7
        %v565 = vsub.s32 1, %v564
        %v566 = vrot.slane %v557, %v565
        %v569 = vmul.f32 %v534, %v562
        %v570 = vmul.f32 %v533, %v566
        %v571 = vadd.f32 %v554, %v569
        %v572 = vadd.f32 %v555, %v570
        %s573 = scalar_lea.vmem %s1, 36
        %v574 = vld [vmem:[%s573] ss:$8 sm:$0x3]
        %v576 = vlaneseq
        %v577 = vshrl.u32 %v576, 7
        %v578 = vsub.s32 0, %v577
        %v579 = vrot.slane %v574, %v578
        %v580 = vlaneseq
        %v581 = vshrl.u32 %v580, 7
        %v582 = vsub.s32 1, %v581
        %v583 = vrot.slane %v574, %v582
        %v586 = vmul.f32 %v540, %v579
        %v587 = vmul.f32 %v539, %v583
        %v588 = vadd.f32 %v571, %v586
        %v589 = vadd.f32 %v572, %v587
        %v590 = vadd.f32 %v469, %v588
        %v591 = vadd.f32 %v470, %v589
        %s592 = scalar_lea.vmem %s2, 2
        %v593 = vld [vmem:[%s592] ss:$8 sm:$0x3]
        %v595 = vlaneseq
        %v596 = vshrl.u32 %v595, 7
        %v597 = vsub.s32 0, %v596
        %v598 = vrot.slane %v593, %v597
        %v599 = vlaneseq
        %v600 = vshrl.u32 %v599, 7
        %v601 = vsub.s32 1, %v600
        %v602 = vrot.slane %v593, %v601
        %v605 = vmul.f32 %v528, %v598
        %v606 = vmul.f32 %v527, %v602
        %s607 = scalar_lea.vmem %s2, 19
        %v608 = vld [vmem:[%s607] ss:$8 sm:$0x3]
        %v610 = vlaneseq
        %v611 = vshrl.u32 %v610, 7
        %v612 = vsub.s32 0, %v611
        %v613 = vrot.slane %v608, %v612
        %v614 = vlaneseq
        %v615 = vshrl.u32 %v614, 7
        %v616 = vsub.s32 1, %v615
        %v617 = vrot.slane %v608, %v616
        %v620 = vmul.f32 %v534, %v613
        %v621 = vmul.f32 %v533, %v617
        %v622 = vadd.f32 %v605, %v620
        %v623 = vadd.f32 %v606, %v621
        %s624 = scalar_lea.vmem %s2, 36
        %v625 = vld [vmem:[%s624] ss:$8 sm:$0x3]
        %v627 = vlaneseq
        %v628 = vshrl.u32 %v627, 7
        %v629 = vsub.s32 0, %v628
        %v630 = vrot.slane %v625, %v629
        %v631 = vlaneseq
        %v632 = vshrl.u32 %v631, 7
        %v633 = vsub.s32 1, %v632
        %v634 = vrot.slane %v625, %v633
        %v637 = vmul.f32 %v540, %v630
        %v638 = vmul.f32 %v539, %v634
        %v639 = vadd.f32 %v622, %v637
        %v640 = vadd.f32 %v623, %v638
        %v641 = vadd.f32 %v520, %v639
        %v642 = vadd.f32 %v521, %v640
        %643 = vrot.lane.b32.xlu0 %v274, 1
        %v644 = vpop.permute.xlu0 %643
        %645 = vrot.lane.b32.xlu0 %v275, 1
        %v646 = vpop.permute.xlu0 %645
        %vm647 = vcmp.lt.s32.totalorder %v288, 1
        %v648 = vsel %vm647, %v644, %v646
        %v649 = vsel %vm647, %v646, %v644
        %650 = vrot.lane.b32.xlu0 %v266, 1
        %v651 = vpop.permute.xlu0 %650
        %652 = vrot.lane.b32.xlu0 %v268, 1
        %v653 = vpop.permute.xlu0 %652
        %v654 = vsel %vm647, %v651, %v653
        %v655 = vsel %vm647, %v653, %v651
        %656 = vrot.lane.b32.xlu0 %v281, 1
        %v657 = vpop.permute.xlu0 %656
        %658 = vrot.lane.b32.xlu0 %v282, 1
        %v659 = vpop.permute.xlu0 %658
        %v660 = vsel %vm647, %v657, %v659
        %v661 = vsel %vm647, %v659, %v657
        %s662 = scalar_lea.vmem %s1, 3
        %v663 = vld [vmem:[%s662] ss:$8 sm:$0x3]
        %v665 = vlaneseq
        %v666 = vshrl.u32 %v665, 7
        %v667 = vsub.s32 0, %v666
        %v668 = vrot.slane %v663, %v667
        %v669 = vlaneseq
        %v670 = vshrl.u32 %v669, 7
        %v671 = vsub.s32 1, %v670
        %v672 = vrot.slane %v663, %v671
        %v675 = vmul.f32 %v649, %v668
        %v676 = vmul.f32 %v648, %v672
        %s677 = scalar_lea.vmem %s1, 20
        %v678 = vld [vmem:[%s677] ss:$8 sm:$0x3]
        %v680 = vlaneseq
        %v681 = vshrl.u32 %v680, 7
        %v682 = vsub.s32 0, %v681
        %v683 = vrot.slane %v678, %v682
        %v684 = vlaneseq
        %v685 = vshrl.u32 %v684, 7
        %v686 = vsub.s32 1, %v685
        %v687 = vrot.slane %v678, %v686
        %v690 = vmul.f32 %v655, %v683
        %v691 = vmul.f32 %v654, %v687
        %v692 = vadd.f32 %v675, %v690
        %v693 = vadd.f32 %v676, %v691
        %s694 = scalar_lea.vmem %s1, 37
        %v695 = vld [vmem:[%s694] ss:$8 sm:$0x3]
        %v697 = vlaneseq
        %v698 = vshrl.u32 %v697, 7
        %v699 = vsub.s32 0, %v698
        %v700 = vrot.slane %v695, %v699
        %v701 = vlaneseq
        %v702 = vshrl.u32 %v701, 7
        %v703 = vsub.s32 1, %v702
        %v704 = vrot.slane %v695, %v703
        %v707 = vmul.f32 %v661, %v700
        %v708 = vmul.f32 %v660, %v704
        %v709 = vadd.f32 %v692, %v707
        %v710 = vadd.f32 %v693, %v708
        %v711 = vadd.f32 %v590, %v709
        %v712 = vadd.f32 %v591, %v710
        %s713 = scalar_lea.vmem %s2, 3
        %v714 = vld [vmem:[%s713] ss:$8 sm:$0x3]
        %v716 = vlaneseq
        %v717 = vshrl.u32 %v716, 7
        %v718 = vsub.s32 0, %v717
        %v719 = vrot.slane %v714, %v718
        %v720 = vlaneseq
        %v721 = vshrl.u32 %v720, 7
        %v722 = vsub.s32 1, %v721
        %v723 = vrot.slane %v714, %v722
        %v726 = vmul.f32 %v649, %v719
        %v727 = vmul.f32 %v648, %v723
        %s728 = scalar_lea.vmem %s2, 20
        %v729 = vld [vmem:[%s728] ss:$8 sm:$0x3]
        %v731 = vlaneseq
        %v732 = vshrl.u32 %v731, 7
        %v733 = vsub.s32 0, %v732
        %v734 = vrot.slane %v729, %v733
        %v735 = vlaneseq
        %v736 = vshrl.u32 %v735, 7
        %v737 = vsub.s32 1, %v736
        %v738 = vrot.slane %v729, %v737
        %v741 = vmul.f32 %v655, %v734
        %v742 = vmul.f32 %v654, %v738
        %v743 = vadd.f32 %v726, %v741
        %v744 = vadd.f32 %v727, %v742
        %s745 = scalar_lea.vmem %s2, 37
        %v746 = vld [vmem:[%s745] ss:$8 sm:$0x3]
        %v748 = vlaneseq
        %v749 = vshrl.u32 %v748, 7
        %v750 = vsub.s32 0, %v749
        %v751 = vrot.slane %v746, %v750
        %v752 = vlaneseq
        %v753 = vshrl.u32 %v752, 7
        %v754 = vsub.s32 1, %v753
        %v755 = vrot.slane %v746, %v754
        %v758 = vmul.f32 %v661, %v751
        %v759 = vmul.f32 %v660, %v755
        %v760 = vadd.f32 %v743, %v758
        %v761 = vadd.f32 %v744, %v759
        %v762 = vadd.f32 %v641, %v760
        %v763 = vadd.f32 %v642, %v761
        %s764 = scalar_lea.vmem %s1, 4
        %v765 = vld [vmem:[%s764] ss:$8 sm:$0x3]
        %v767 = vlaneseq
        %v768 = vshrl.u32 %v767, 7
        %v769 = vsub.s32 0, %v768
        %v770 = vrot.slane %v765, %v769
        %v771 = vlaneseq
        %v772 = vshrl.u32 %v771, 7
        %v773 = vsub.s32 1, %v772
        %v774 = vrot.slane %v765, %v773
        %v777 = vmul.f32 %v274, %v770
        %v778 = vmul.f32 %v275, %v774
        %s779 = scalar_lea.vmem %s1, 21
        %v780 = vld [vmem:[%s779] ss:$8 sm:$0x3]
        %v782 = vlaneseq
        %v783 = vshrl.u32 %v782, 7
        %v784 = vsub.s32 0, %v783
        %v785 = vrot.slane %v780, %v784
        %v786 = vlaneseq
        %v787 = vshrl.u32 %v786, 7
        %v788 = vsub.s32 1, %v787
        %v789 = vrot.slane %v780, %v788
        %v790 = vcombine.low %v785, %v789
        %v792 = vmul.f32 %v266, %v790
        %v794 = vcombine.high %v792, %v792
        %v796 = vadd.f32 %v777, %v792
        %v797 = vadd.f32 %v778, %v794
        %s798 = scalar_lea.vmem %s1, 38
        %v799 = vld [vmem:[%s798] ss:$8 sm:$0x3]
        %v801 = vlaneseq
        %v802 = vshrl.u32 %v801, 7
        %v803 = vsub.s32 0, %v802
        %v804 = vrot.slane %v799, %v803
        %v805 = vlaneseq
        %v806 = vshrl.u32 %v805, 7
        %v807 = vsub.s32 1, %v806
        %v808 = vrot.slane %v799, %v807
        %v811 = vmul.f32 %v281, %v804
        %v812 = vmul.f32 %v282, %v808
        %v813 = vadd.f32 %v796, %v811
        %v814 = vadd.f32 %v797, %v812
        %v815 = vadd.f32 %v711, %v813
        %v816 = vadd.f32 %v712, %v814
        %s817 = scalar_lea.vmem %s2, 4
        %v818 = vld [vmem:[%s817] ss:$8 sm:$0x3]
        %v820 = vlaneseq
        %v821 = vshrl.u32 %v820, 7
        %v822 = vsub.s32 0, %v821
        %v823 = vrot.slane %v818, %v822
        %v824 = vlaneseq
        %v825 = vshrl.u32 %v824, 7
        %v826 = vsub.s32 1, %v825
        %v827 = vrot.slane %v818, %v826
        %v830 = vmul.f32 %v274, %v823
        %v831 = vmul.f32 %v275, %v827
        %s832 = scalar_lea.vmem %s2, 21
        %v833 = vld [vmem:[%s832] ss:$8 sm:$0x3]
        %v835 = vlaneseq
        %v836 = vshrl.u32 %v835, 7
        %v837 = vsub.s32 0, %v836
        %v838 = vrot.slane %v833, %v837
        %v839 = vlaneseq
        %v840 = vshrl.u32 %v839, 7
        %v841 = vsub.s32 1, %v840
        %v842 = vrot.slane %v833, %v841
        %v843 = vcombine.low %v838, %v842
        %v845 = vmul.f32 %v266, %v843
        %v847 = vcombine.high %v845, %v845
        %v849 = vadd.f32 %v830, %v845
        %v850 = vadd.f32 %v831, %v847
        %s851 = scalar_lea.vmem %s2, 38
        %v852 = vld [vmem:[%s851] ss:$8 sm:$0x3]
        %v854 = vlaneseq
        %v855 = vshrl.u32 %v854, 7
        %v856 = vsub.s32 0, %v855
        %v857 = vrot.slane %v852, %v856
        %v858 = vlaneseq
        %v859 = vshrl.u32 %v858, 7
        %v860 = vsub.s32 1, %v859
        %v861 = vrot.slane %v852, %v860
        %v864 = vmul.f32 %v281, %v857
        %v865 = vmul.f32 %v282, %v861
        %v866 = vadd.f32 %v849, %v864
        %v867 = vadd.f32 %v850, %v865
        %v868 = vadd.f32 %v762, %v866
        %v869 = vadd.f32 %v763, %v867
        %870 = vrot.lane.b32.xlu0 %v274, 127
        %v871 = vpop.permute.xlu0 %870
        %872 = vrot.lane.b32.xlu0 %v275, 127
        %v873 = vpop.permute.xlu0 %872
        %vm874 = vcmp.lt.s32.totalorder %v288, 127
        %v875 = vsel %vm874, %v871, %v873
        %v876 = vsel %vm874, %v873, %v871
        %877 = vrot.lane.b32.xlu0 %v266, 127
        %v878 = vpop.permute.xlu0 %877
        %879 = vrot.lane.b32.xlu0 %v268, 127
        %v880 = vpop.permute.xlu0 %879
        %v881 = vsel %vm874, %v878, %v880
        %v882 = vsel %vm874, %v880, %v878
        %883 = vrot.lane.b32.xlu0 %v281, 127
        %v884 = vpop.permute.xlu0 %883
        %885 = vrot.lane.b32.xlu0 %v282, 127
        %v886 = vpop.permute.xlu0 %885
        %v887 = vsel %vm874, %v884, %v886
        %v888 = vsel %vm874, %v886, %v884
        %s889 = scalar_lea.vmem %s1, 5
        %v890 = vld [vmem:[%s889] ss:$8 sm:$0x3]
        %v892 = vlaneseq
        %v893 = vshrl.u32 %v892, 7
        %v894 = vsub.s32 0, %v893
        %v895 = vrot.slane %v890, %v894
        %v896 = vlaneseq
        %v897 = vshrl.u32 %v896, 7
        %v898 = vsub.s32 1, %v897
        %v899 = vrot.slane %v890, %v898
        %v902 = vmul.f32 %v875, %v895
        %v903 = vmul.f32 %v876, %v899
        %s904 = scalar_lea.vmem %s1, 22
        %v905 = vld [vmem:[%s904] ss:$8 sm:$0x3]
        %v907 = vlaneseq
        %v908 = vshrl.u32 %v907, 7
        %v909 = vsub.s32 0, %v908
        %v910 = vrot.slane %v905, %v909
        %v911 = vlaneseq
        %v912 = vshrl.u32 %v911, 7
        %v913 = vsub.s32 1, %v912
        %v914 = vrot.slane %v905, %v913
        %v917 = vmul.f32 %v881, %v910
        %v918 = vmul.f32 %v882, %v914
        %v919 = vadd.f32 %v902, %v917
        %v920 = vadd.f32 %v903, %v918
        %s921 = scalar_lea.vmem %s1, 39
        %v922 = vld [vmem:[%s921] ss:$8 sm:$0x3]
        %v924 = vlaneseq
        %v925 = vshrl.u32 %v924, 7
        %v926 = vsub.s32 0, %v925
        %v927 = vrot.slane %v922, %v926
        %v928 = vlaneseq
        %v929 = vshrl.u32 %v928, 7
        %v930 = vsub.s32 1, %v929
        %v931 = vrot.slane %v922, %v930
        %v934 = vmul.f32 %v887, %v927
        %v935 = vmul.f32 %v888, %v931
        %v936 = vadd.f32 %v919, %v934
        %v937 = vadd.f32 %v920, %v935
        %v938 = vadd.f32 %v815, %v936
        %v939 = vadd.f32 %v816, %v937
        %s940 = scalar_lea.vmem %s2, 5
        %v941 = vld [vmem:[%s940] ss:$8 sm:$0x3]
        %v943 = vlaneseq
        %v944 = vshrl.u32 %v943, 7
        %v945 = vsub.s32 0, %v944
        %v946 = vrot.slane %v941, %v945
        %v947 = vlaneseq
        %v948 = vshrl.u32 %v947, 7
        %v949 = vsub.s32 1, %v948
        %v950 = vrot.slane %v941, %v949
        %v953 = vmul.f32 %v875, %v946
        %v954 = vmul.f32 %v876, %v950
        %s955 = scalar_lea.vmem %s2, 22
        %v956 = vld [vmem:[%s955] ss:$8 sm:$0x3]
        %v958 = vlaneseq
        %v959 = vshrl.u32 %v958, 7
        %v960 = vsub.s32 0, %v959
        %v961 = vrot.slane %v956, %v960
        %v962 = vlaneseq
        %v963 = vshrl.u32 %v962, 7
        %v964 = vsub.s32 1, %v963
        %v965 = vrot.slane %v956, %v964
        %v968 = vmul.f32 %v881, %v961
        %v969 = vmul.f32 %v882, %v965
        %v970 = vadd.f32 %v953, %v968
        %v971 = vadd.f32 %v954, %v969
        %s972 = scalar_lea.vmem %s2, 39
        %v973 = vld [vmem:[%s972] ss:$8 sm:$0x3]
        %v975 = vlaneseq
        %v976 = vshrl.u32 %v975, 7
        %v977 = vsub.s32 0, %v976
        %v978 = vrot.slane %v973, %v977
        %v979 = vlaneseq
        %v980 = vshrl.u32 %v979, 7
        %v981 = vsub.s32 1, %v980
        %v982 = vrot.slane %v973, %v981
        %v985 = vmul.f32 %v887, %v978
        %v986 = vmul.f32 %v888, %v982
        %v987 = vadd.f32 %v970, %v985
        %v988 = vadd.f32 %v971, %v986
        %v989 = vadd.f32 %v868, %v987
        %v990 = vadd.f32 %v869, %v988
        %991 = vrot.lane.b32.xlu0 %v274, 113
        %v992 = vpop.permute.xlu0 %991
        %993 = vrot.lane.b32.xlu0 %v275, 113
        %v994 = vpop.permute.xlu0 %993
        %vm995 = vcmp.lt.s32.totalorder %v288, 113
        %v996 = vsel %vm995, %v992, %v994
        %v997 = vsel %vm995, %v994, %v992
        %998 = vrot.lane.b32.xlu0 %v266, 113
        %v999 = vpop.permute.xlu0 %998
        %1000 = vrot.lane.b32.xlu0 %v268, 113
        %v1001 = vpop.permute.xlu0 %1000
        %v1002 = vsel %vm995, %v999, %v1001
        %v1003 = vsel %vm995, %v1001, %v999
        %1004 = vrot.lane.b32.xlu0 %v281, 113
        %v1005 = vpop.permute.xlu0 %1004
        %1006 = vrot.lane.b32.xlu0 %v282, 113
        %v1007 = vpop.permute.xlu0 %1006
        %v1008 = vsel %vm995, %v1005, %v1007
        %v1009 = vsel %vm995, %v1007, %v1005
        %s1010 = scalar_lea.vmem %s1, 6
        %v1011 = vld [vmem:[%s1010] ss:$8 sm:$0x3]
        %v1013 = vlaneseq
        %v1014 = vshrl.u32 %v1013, 7
        %v1015 = vsub.s32 0, %v1014
        %v1016 = vrot.slane %v1011, %v1015
        %v1017 = vlaneseq
        %v1018 = vshrl.u32 %v1017, 7
        %v1019 = vsub.s32 1, %v1018
        %v1020 = vrot.slane %v1011, %v1019
        %v1023 = vmul.f32 %v996, %v1016
        %v1024 = vmul.f32 %v997, %v1020
        %s1025 = scalar_lea.vmem %s1, 23
        %v1026 = vld [vmem:[%s1025] ss:$8 sm:$0x3]
        %v1028 = vlaneseq
        %v1029 = vshrl.u32 %v1028, 7
        %v1030 = vsub.s32 0, %v1029
        %v1031 = vrot.slane %v1026, %v1030
        %v1032 = vlaneseq
        %v1033 = vshrl.u32 %v1032, 7
        %v1034 = vsub.s32 1, %v1033
        %v1035 = vrot.slane %v1026, %v1034
        %v1038 = vmul.f32 %v1002, %v1031
        %v1039 = vmul.f32 %v1003, %v1035
        %v1040 = vadd.f32 %v1023, %v1038
        %v1041 = vadd.f32 %v1024, %v1039
        %s1042 = scalar_lea.vmem %s1, 48
        %v1043 = vld [vmem:[%s1042] ss:$8 sm:$0x3]
        %v1045 = vlaneseq
        %v1046 = vshrl.u32 %v1045, 7
        %v1047 = vsub.s32 0, %v1046
        %v1048 = vrot.slane %v1043, %v1047
        %v1049 = vlaneseq
        %v1050 = vshrl.u32 %v1049, 7
        %v1051 = vsub.s32 1, %v1050
        %v1052 = vrot.slane %v1043, %v1051
        %v1055 = vmul.f32 %v1008, %v1048
        %v1056 = vmul.f32 %v1009, %v1052
        %v1057 = vadd.f32 %v1040, %v1055
        %v1058 = vadd.f32 %v1041, %v1056
        %v1059 = vadd.f32 %v938, %v1057
        %v1060 = vadd.f32 %v939, %v1058
        %s1061 = scalar_lea.vmem %s2, 6
        %v1062 = vld [vmem:[%s1061] ss:$8 sm:$0x3]
        %v1064 = vlaneseq
        %v1065 = vshrl.u32 %v1064, 7
        %v1066 = vsub.s32 0, %v1065
        %v1067 = vrot.slane %v1062, %v1066
        %v1068 = vlaneseq
        %v1069 = vshrl.u32 %v1068, 7
        %v1070 = vsub.s32 1, %v1069
        %v1071 = vrot.slane %v1062, %v1070
        %v1074 = vmul.f32 %v996, %v1067
        %v1075 = vmul.f32 %v997, %v1071
        %s1076 = scalar_lea.vmem %s2, 23
        %v1077 = vld [vmem:[%s1076] ss:$8 sm:$0x3]
        %v1079 = vlaneseq
        %v1080 = vshrl.u32 %v1079, 7
        %v1081 = vsub.s32 0, %v1080
        %v1082 = vrot.slane %v1077, %v1081
        %v1083 = vlaneseq
        %v1084 = vshrl.u32 %v1083, 7
        %v1085 = vsub.s32 1, %v1084
        %v1086 = vrot.slane %v1077, %v1085
        %v1089 = vmul.f32 %v1002, %v1082
        %v1090 = vmul.f32 %v1003, %v1086
        %v1091 = vadd.f32 %v1074, %v1089
        %v1092 = vadd.f32 %v1075, %v1090
        %s1093 = scalar_lea.vmem %s2, 48
        %v1094 = vld [vmem:[%s1093] ss:$8 sm:$0x3]
        %v1096 = vlaneseq
        %v1097 = vshrl.u32 %v1096, 7
        %v1098 = vsub.s32 0, %v1097
        %v1099 = vrot.slane %v1094, %v1098
        %v1100 = vlaneseq
        %v1101 = vshrl.u32 %v1100, 7
        %v1102 = vsub.s32 1, %v1101
        %v1103 = vrot.slane %v1094, %v1102
        %v1106 = vmul.f32 %v1008, %v1099
        %v1107 = vmul.f32 %v1009, %v1103
        %v1108 = vadd.f32 %v1091, %v1106
        %v1109 = vadd.f32 %v1092, %v1107
        %v1110 = vadd.f32 %v989, %v1108
        %v1111 = vadd.f32 %v990, %v1109
        %1112 = vrot.lane.b32.xlu0 %v274, 112
        %v1113 = vpop.permute.xlu0 %1112
        %1114 = vrot.lane.b32.xlu0 %v275, 112
        %v1115 = vpop.permute.xlu0 %1114
        %vm1116 = vcmp.lt.s32.totalorder %v288, 112
        %v1117 = vsel %vm1116, %v1113, %v1115
        %v1118 = vsel %vm1116, %v1115, %v1113
        %1119 = vrot.lane.b32.xlu0 %v266, 112
        %v1120 = vpop.permute.xlu0 %1119
        %1121 = vrot.lane.b32.xlu0 %v268, 112
        %v1122 = vpop.permute.xlu0 %1121
        %v1123 = vsel %vm1116, %v1120, %v1122
        %v1124 = vsel %vm1116, %v1122, %v1120
        %1125 = vrot.lane.b32.xlu0 %v281, 112
        %v1126 = vpop.permute.xlu0 %1125
        %1127 = vrot.lane.b32.xlu0 %v282, 112
        %v1128 = vpop.permute.xlu0 %1127
        %v1129 = vsel %vm1116, %v1126, %v1128
        %v1130 = vsel %vm1116, %v1128, %v1126
        %s1131 = scalar_lea.vmem %s1, 7
        %v1132 = vld [vmem:[%s1131] ss:$8 sm:$0x3]
        %v1134 = vlaneseq
        %v1135 = vshrl.u32 %v1134, 7
        %v1136 = vsub.s32 0, %v1135
        %v1137 = vrot.slane %v1132, %v1136
        %v1138 = vlaneseq
        %v1139 = vshrl.u32 %v1138, 7
        %v1140 = vsub.s32 1, %v1139
        %v1141 = vrot.slane %v1132, %v1140
        %v1144 = vmul.f32 %v1117, %v1137
        %v1145 = vmul.f32 %v1118, %v1141
        %s1146 = scalar_lea.vmem %s1, 32
        %v1147 = vld [vmem:[%s1146] ss:$8 sm:$0x3]
        %v1149 = vlaneseq
        %v1150 = vshrl.u32 %v1149, 7
        %v1151 = vsub.s32 0, %v1150
        %v1152 = vrot.slane %v1147, %v1151
        %v1153 = vlaneseq
        %v1154 = vshrl.u32 %v1153, 7
        %v1155 = vsub.s32 1, %v1154
        %v1156 = vrot.slane %v1147, %v1155
        %v1159 = vmul.f32 %v1123, %v1152
        %v1160 = vmul.f32 %v1124, %v1156
        %v1161 = vadd.f32 %v1144, %v1159
        %v1162 = vadd.f32 %v1145, %v1160
        %s1163 = scalar_lea.vmem %s1, 49
        %v1164 = vld [vmem:[%s1163] ss:$8 sm:$0x3]
        %v1166 = vlaneseq
        %v1167 = vshrl.u32 %v1166, 7
        %v1168 = vsub.s32 0, %v1167
        %v1169 = vrot.slane %v1164, %v1168
        %v1170 = vlaneseq
        %v1171 = vshrl.u32 %v1170, 7
        %v1172 = vsub.s32 1, %v1171
        %v1173 = vrot.slane %v1164, %v1172
        %v1176 = vmul.f32 %v1129, %v1169
        %v1177 = vmul.f32 %v1130, %v1173
        %v1178 = vadd.f32 %v1161, %v1176
        %v1179 = vadd.f32 %v1162, %v1177
        %v1180 = vadd.f32 %v1059, %v1178
        %v1181 = vadd.f32 %v1060, %v1179
        %s1182 = scalar_lea.vmem %s2, 7
        %v1183 = vld [vmem:[%s1182] ss:$8 sm:$0x3]
        %v1185 = vlaneseq
        %v1186 = vshrl.u32 %v1185, 7
        %v1187 = vsub.s32 0, %v1186
        %v1188 = vrot.slane %v1183, %v1187
        %v1189 = vlaneseq
        %v1190 = vshrl.u32 %v1189, 7
        %v1191 = vsub.s32 1, %v1190
        %v1192 = vrot.slane %v1183, %v1191
        %v1195 = vmul.f32 %v1117, %v1188
        %v1196 = vmul.f32 %v1118, %v1192
        %s1197 = scalar_lea.vmem %s2, 32
        %v1198 = vld [vmem:[%s1197] ss:$8 sm:$0x3]
        %v1200 = vlaneseq
        %v1201 = vshrl.u32 %v1200, 7
        %v1202 = vsub.s32 0, %v1201
        %v1203 = vrot.slane %v1198, %v1202
        %v1204 = vlaneseq
        %v1205 = vshrl.u32 %v1204, 7
        %v1206 = vsub.s32 1, %v1205
        %v1207 = vrot.slane %v1198, %v1206
        %v1210 = vmul.f32 %v1123, %v1203
        %v1211 = vmul.f32 %v1124, %v1207
        %v1212 = vadd.f32 %v1195, %v1210
        %v1213 = vadd.f32 %v1196, %v1211
        %s1214 = scalar_lea.vmem %s2, 49
        %v1215 = vld [vmem:[%s1214] ss:$8 sm:$0x3]
        %v1217 = vlaneseq
        %v1218 = vshrl.u32 %v1217, 7
        %v1219 = vsub.s32 0, %v1218
        %v1220 = vrot.slane %v1215, %v1219
        %v1221 = vlaneseq
        %v1222 = vshrl.u32 %v1221, 7
        %v1223 = vsub.s32 1, %v1222
        %v1224 = vrot.slane %v1215, %v1223
        %v1227 = vmul.f32 %v1129, %v1220
        %v1228 = vmul.f32 %v1130, %v1224
        %v1229 = vadd.f32 %v1212, %v1227
        %v1230 = vadd.f32 %v1213, %v1228
        %v1231 = vadd.f32 %v1110, %v1229
        %v1232 = vadd.f32 %v1111, %v1230
        %1233 = vrot.lane.b32.xlu0 %v274, 111
        %v1234 = vpop.permute.xlu0 %1233
        %1235 = vrot.lane.b32.xlu0 %v275, 111
        %v1236 = vpop.permute.xlu0 %1235
        %vm1237 = vcmp.lt.s32.totalorder %v288, 111
        %v1238 = vsel %vm1237, %v1234, %v1236
        %v1239 = vsel %vm1237, %v1236, %v1234
        %1240 = vrot.lane.b32.xlu0 %v266, 111
        %v1241 = vpop.permute.xlu0 %1240
        %1242 = vrot.lane.b32.xlu0 %v268, 111
        %v1243 = vpop.permute.xlu0 %1242
        %v1244 = vsel %vm1237, %v1241, %v1243
        %v1245 = vsel %vm1237, %v1243, %v1241
        %1246 = vrot.lane.b32.xlu0 %v281, 111
        %v1247 = vpop.permute.xlu0 %1246
        %1248 = vrot.lane.b32.xlu0 %v282, 111
        %v1249 = vpop.permute.xlu0 %1248
        %v1250 = vsel %vm1237, %v1247, %v1249
        %v1251 = vsel %vm1237, %v1249, %v1247
        %s1252 = scalar_lea.vmem %s1, 16
        %v1253 = vld [vmem:[%s1252] ss:$8 sm:$0x3]
        %v1255 = vlaneseq
        %v1256 = vshrl.u32 %v1255, 7
        %v1257 = vsub.s32 0, %v1256
        %v1258 = vrot.slane %v1253, %v1257
        %v1259 = vlaneseq
        %v1260 = vshrl.u32 %v1259, 7
        %v1261 = vsub.s32 1, %v1260
        %v1262 = vrot.slane %v1253, %v1261
        %v1265 = vmul.f32 %v1238, %v1258
        %v1266 = vmul.f32 %v1239, %v1262
        %s1267 = scalar_lea.vmem %s1, 33
        %v1268 = vld [vmem:[%s1267] ss:$8 sm:$0x3]
        %v1270 = vlaneseq
        %v1271 = vshrl.u32 %v1270, 7
        %v1272 = vsub.s32 0, %v1271
        %v1273 = vrot.slane %v1268, %v1272
        %v1274 = vlaneseq
        %v1275 = vshrl.u32 %v1274, 7
        %v1276 = vsub.s32 1, %v1275
        %v1277 = vrot.slane %v1268, %v1276
        %v1280 = vmul.f32 %v1244, %v1273
        %v1281 = vmul.f32 %v1245, %v1277
        %v1282 = vadd.f32 %v1265, %v1280
        %v1283 = vadd.f32 %v1266, %v1281
        %s1284 = scalar_lea.vmem %s1, 50
        %v1285 = vld [vmem:[%s1284] ss:$8 sm:$0x3]
        %v1287 = vlaneseq
        %v1288 = vshrl.u32 %v1287, 7
        %v1289 = vsub.s32 0, %v1288
        %v1290 = vrot.slane %v1285, %v1289
        %v1291 = vlaneseq
        %v1292 = vshrl.u32 %v1291, 7
        %v1293 = vsub.s32 1, %v1292
        %v1294 = vrot.slane %v1285, %v1293
        %v1297 = vmul.f32 %v1250, %v1290
        %v1298 = vmul.f32 %v1251, %v1294
        %v1299 = vadd.f32 %v1282, %v1297
        %v1300 = vadd.f32 %v1283, %v1298
        %v1301 = vadd.f32 %v1180, %v1299
        %v1302 = vadd.f32 %v1181, %v1300
        %s1303 = scalar_lea.vmem %s2, 16
        %v1304 = vld [vmem:[%s1303] ss:$8 sm:$0x3]
        %v1306 = vlaneseq
        %v1307 = vshrl.u32 %v1306, 7
        %v1308 = vsub.s32 0, %v1307
        %v1309 = vrot.slane %v1304, %v1308
        %v1310 = vlaneseq
        %v1311 = vshrl.u32 %v1310, 7
        %v1312 = vsub.s32 1, %v1311
        %v1313 = vrot.slane %v1304, %v1312
        %v1316 = vmul.f32 %v1238, %v1309
        %v1317 = vmul.f32 %v1239, %v1313
        %s1318 = scalar_lea.vmem %s2, 33
        %v1319 = vld [vmem:[%s1318] ss:$8 sm:$0x3]
        %v1321 = vlaneseq
        %v1322 = vshrl.u32 %v1321, 7
        %v1323 = vsub.s32 0, %v1322
        %v1324 = vrot.slane %v1319, %v1323
        %v1325 = vlaneseq
        %v1326 = vshrl.u32 %v1325, 7
        %v1327 = vsub.s32 1, %v1326
        %v1328 = vrot.slane %v1319, %v1327
        %v1331 = vmul.f32 %v1244, %v1324
        %v1332 = vmul.f32 %v1245, %v1328
        %v1333 = vadd.f32 %v1316, %v1331
        %v1334 = vadd.f32 %v1317, %v1332
        %s1335 = scalar_lea.vmem %s2, 50
        %v1336 = vld [vmem:[%s1335] ss:$8 sm:$0x3]
        %v1338 = vlaneseq
        %v1339 = vshrl.u32 %v1338, 7
        %v1340 = vsub.s32 0, %v1339
        %v1341 = vrot.slane %v1336, %v1340
        %v1342 = vlaneseq
        %v1343 = vshrl.u32 %v1342, 7
        %v1344 = vsub.s32 1, %v1343
        %v1345 = vrot.slane %v1336, %v1344
        %v1348 = vmul.f32 %v1250, %v1341
        %v1349 = vmul.f32 %v1251, %v1345
        %v1350 = vadd.f32 %v1333, %v1348
        %v1351 = vadd.f32 %v1334, %v1349
        %v1352 = vadd.f32 %v1231, %v1350
        %v1353 = vadd.f32 %v1232, %v1351
        %v1354 = vld [vmem:[%s4] ss:$2 sm:$0x3]
        %v1356 = vlaneseq
        %v1357 = vshrl.u32 %v1356, 7
        %v1358 = vsub.s32 0, %v1357
        %v1359 = vrot.slane %v1354, %v1358
        %v1360 = vlaneseq
        %v1361 = vshrl.u32 %v1360, 7
        %v1362 = vsub.s32 1, %v1361
        %v1363 = vrot.slane %v1354, %v1362
        %v1366 = vadd.f32 %v1301, %v1359
        %v1367 = vadd.f32 %v1302, %v1363
        %v1368 = vmax.f32 %v1366, 0.0
        %v1369 = vmax.f32 %v1367, 0.0
        %v1372 = vrot.slane %v1368, 7
        %v1373 = vrot.slane %v1369, 7
        %v1376 = vsel %vm273, 0.0, %v1372
        %v1377 = vsel %vm273, 0.0, %v1373
        %v1378 = vrot.slane %v1368, 1
        %v1379 = vrot.slane %v1369, 1
        %v1382 = vsel %vm280, %v1378, 0.0
        %v1383 = vsel %vm280, %v1379, 0.0
        %1384 = vrot.lane.b32.xlu0 %v1376, 17
        %v1385 = vpop.permute.xlu0 %1384
        %1386 = vrot.lane.b32.xlu0 %v1377, 17
        %v1387 = vpop.permute.xlu0 %1386
        %v1388 = vsel %vm289, %v1385, %v1387
        %v1389 = vsel %vm289, %v1387, %v1385
        %1390 = vrot.lane.b32.xlu0 %v1368, 17
        %v1391 = vpop.permute.xlu0 %1390
        %1392 = vrot.lane.b32.xlu0 %v1369, 17
        %v1393 = vpop.permute.xlu0 %1392
        %v1394 = vsel %vm289, %v1391, %v1393
        %v1395 = vsel %vm289, %v1393, %v1391
        %1396 = vrot.lane.b32.xlu0 %v1382, 17
        %v1397 = vpop.permute.xlu0 %1396
        %1398 = vrot.lane.b32.xlu0 %v1383, 17
        %v1399 = vpop.permute.xlu0 %1398
        %v1400 = vsel %vm289, %v1397, %v1399
        %v1401 = vsel %vm289, %v1399, %v1397
        %v1402 = vld [vmem:[%s3] ss:$8 sm:$0x3]
        %v1404 = vlaneseq
        %v1405 = vshrl.u32 %v1404, 7
        %v1406 = vsub.s32 0, %v1405
        %v1407 = vrot.slane %v1402, %v1406
        %v1408 = vlaneseq
        %v1409 = vshrl.u32 %v1408, 7
        %v1410 = vsub.s32 1, %v1409
        %v1411 = vrot.slane %v1402, %v1410
        %v1414 = vmul.f32 %v1389, %v1407
        %v1415 = vmul.f32 %v1388, %v1411
        %s1416 = scalar_lea.vmem %s3, 17
        %v1417 = vld [vmem:[%s1416] ss:$8 sm:$0x3]
        %v1419 = vlaneseq
        %v1420 = vshrl.u32 %v1419, 7
        %v1421 = vsub.s32 0, %v1420
        %v1422 = vrot.slane %v1417, %v1421
        %v1423 = vlaneseq
        %v1424 = vshrl.u32 %v1423, 7
        %v1425 = vsub.s32 1, %v1424
        %v1426 = vrot.slane %v1417, %v1425
        %v1429 = vmul.f32 %v1395, %v1422
        %v1430 = vmul.f32 %v1394, %v1426
        %v1431 = vadd.f32 %v1414, %v1429
        %v1432 = vadd.f32 %v1415, %v1430
        %s1433 = scalar_lea.vmem %s3, 34
        %v1434 = vld [vmem:[%s1433] ss:$8 sm:$0x3]
        %v1436 = vlaneseq
        %v1437 = vshrl.u32 %v1436, 7
        %v1438 = vsub.s32 0, %v1437
        %v1439 = vrot.slane %v1434, %v1438
        %v1440 = vlaneseq
        %v1441 = vshrl.u32 %v1440, 7
        %v1442 = vsub.s32 1, %v1441
        %v1443 = vrot.slane %v1434, %v1442
        %v1446 = vmul.f32 %v1401, %v1439
        %v1447 = vmul.f32 %v1400, %v1443
        %v1448 = vadd.f32 %v1431, %v1446
        %v1449 = vadd.f32 %v1432, %v1447
        %v1450 = vadd.f32 %v1352, %v1448
        %v1451 = vadd.f32 %v1353, %v1449
        %1452 = vrot.lane.b32.xlu0 %v1376, 16
        %v1453 = vpop.permute.xlu0 %1452
        %1454 = vrot.lane.b32.xlu0 %v1377, 16
        %v1455 = vpop.permute.xlu0 %1454
        %v1456 = vsel %vm405, %v1453, %v1455
        %v1457 = vsel %vm405, %v1455, %v1453
        %1458 = vrot.lane.b32.xlu0 %v1368, 16
        %v1459 = vpop.permute.xlu0 %1458
        %1460 = vrot.lane.b32.xlu0 %v1369, 16
        %v1461 = vpop.permute.xlu0 %1460
        %v1462 = vsel %vm405, %v1459, %v1461
        %v1463 = vsel %vm405, %v1461, %v1459
        %1464 = vrot.lane.b32.xlu0 %v1382, 16
        %v1465 = vpop.permute.xlu0 %1464
        %1466 = vrot.lane.b32.xlu0 %v1383, 16
        %v1467 = vpop.permute.xlu0 %1466
        %v1468 = vsel %vm405, %v1465, %v1467
        %v1469 = vsel %vm405, %v1467, %v1465
        %s1470 = scalar_lea.vmem %s3, 1
        %v1471 = vld [vmem:[%s1470] ss:$8 sm:$0x3]
        %v1473 = vlaneseq
        %v1474 = vshrl.u32 %v1473, 7
        %v1475 = vsub.s32 0, %v1474
        %v1476 = vrot.slane %v1471, %v1475
        %v1477 = vlaneseq
        %v1478 = vshrl.u32 %v1477, 7
        %v1479 = vsub.s32 1, %v1478
        %v1480 = vrot.slane %v1471, %v1479
        %v1483 = vmul.f32 %v1457, %v1476
        %v1484 = vmul.f32 %v1456, %v1480
        %s1485 = scalar_lea.vmem %s3, 18
        %v1486 = vld [vmem:[%s1485] ss:$8 sm:$0x3]
        %v1488 = vlaneseq
        %v1489 = vshrl.u32 %v1488, 7
        %v1490 = vsub.s32 0, %v1489
        %v1491 = vrot.slane %v1486, %v1490
        %v1492 = vlaneseq
        %v1493 = vshrl.u32 %v1492, 7
        %v1494 = vsub.s32 1, %v1493
        %v1495 = vrot.slane %v1486, %v1494
        %v1498 = vmul.f32 %v1463, %v1491
        %v1499 = vmul.f32 %v1462, %v1495
        %v1500 = vadd.f32 %v1483, %v1498
        %v1501 = vadd.f32 %v1484, %v1499
        %s1502 = scalar_lea.vmem %s3, 35
        %v1503 = vld [vmem:[%s1502] ss:$8 sm:$0x3]
        %v1505 = vlaneseq
        %v1506 = vshrl.u32 %v1505, 7
        %v1507 = vsub.s32 0, %v1506
        %v1508 = vrot.slane %v1503, %v1507
        %v1509 = vlaneseq
        %v1510 = vshrl.u32 %v1509, 7
        %v1511 = vsub.s32 1, %v1510
        %v1512 = vrot.slane %v1503, %v1511
        %v1515 = vmul.f32 %v1469, %v1508
        %v1516 = vmul.f32 %v1468, %v1512
        %v1517 = vadd.f32 %v1500, %v1515
        %v1518 = vadd.f32 %v1501, %v1516
        %v1519 = vadd.f32 %v1450, %v1517
        %v1520 = vadd.f32 %v1451, %v1518
        %1521 = vrot.lane.b32.xlu0 %v1376, 15
        %v1522 = vpop.permute.xlu0 %1521
        %1523 = vrot.lane.b32.xlu0 %v1377, 15
        %v1524 = vpop.permute.xlu0 %1523
        %v1525 = vsel %vm526, %v1522, %v1524
        %v1526 = vsel %vm526, %v1524, %v1522
        %1527 = vrot.lane.b32.xlu0 %v1368, 15
        %v1528 = vpop.permute.xlu0 %1527
        %1529 = vrot.lane.b32.xlu0 %v1369, 15
        %v1530 = vpop.permute.xlu0 %1529
        %v1531 = vsel %vm526, %v1528, %v1530
        %v1532 = vsel %vm526, %v1530, %v1528
        %1533 = vrot.lane.b32.xlu0 %v1382, 15
        %v1534 = vpop.permute.xlu0 %1533
        %1535 = vrot.lane.b32.xlu0 %v1383, 15
        %v1536 = vpop.permute.xlu0 %1535
        %v1537 = vsel %vm526, %v1534, %v1536
        %v1538 = vsel %vm526, %v1536, %v1534
        %s1539 = scalar_lea.vmem %s3, 2
        %v1540 = vld [vmem:[%s1539] ss:$8 sm:$0x3]
        %v1542 = vlaneseq
        %v1543 = vshrl.u32 %v1542, 7
        %v1544 = vsub.s32 0, %v1543
        %v1545 = vrot.slane %v1540, %v1544
        %v1546 = vlaneseq
        %v1547 = vshrl.u32 %v1546, 7
        %v1548 = vsub.s32 1, %v1547
        %v1549 = vrot.slane %v1540, %v1548
        %v1552 = vmul.f32 %v1526, %v1545
        %v1553 = vmul.f32 %v1525, %v1549
        %s1554 = scalar_lea.vmem %s3, 19
        %v1555 = vld [vmem:[%s1554] ss:$8 sm:$0x3]
        %v1557 = vlaneseq
        %v1558 = vshrl.u32 %v1557, 7
        %v1559 = vsub.s32 0, %v1558
        %v1560 = vrot.slane %v1555, %v1559
        %v1561 = vlaneseq
        %v1562 = vshrl.u32 %v1561, 7
        %v1563 = vsub.s32 1, %v1562
        %v1564 = vrot.slane %v1555, %v1563
        %v1567 = vmul.f32 %v1532, %v1560
        %v1568 = vmul.f32 %v1531, %v1564
        %v1569 = vadd.f32 %v1552, %v1567
        %v1570 = vadd.f32 %v1553, %v1568
        %s1571 = scalar_lea.vmem %s3, 36
        %v1572 = vld [vmem:[%s1571] ss:$8 sm:$0x3]
        %v1574 = vlaneseq
        %v1575 = vshrl.u32 %v1574, 7
        %v1576 = vsub.s32 0, %v1575
        %v1577 = vrot.slane %v1572, %v1576
        %v1578 = vlaneseq
        %v1579 = vshrl.u32 %v1578, 7
        %v1580 = vsub.s32 1, %v1579
        %v1581 = vrot.slane %v1572, %v1580
        %v1584 = vmul.f32 %v1538, %v1577
        %v1585 = vmul.f32 %v1537, %v1581
        %v1586 = vadd.f32 %v1569, %v1584
        %v1587 = vadd.f32 %v1570, %v1585
        %v1588 = vadd.f32 %v1519, %v1586
        %v1589 = vadd.f32 %v1520, %v1587
        %1590 = vrot.lane.b32.xlu0 %v1376, 1
        %v1591 = vpop.permute.xlu0 %1590
        %1592 = vrot.lane.b32.xlu0 %v1377, 1
        %v1593 = vpop.permute.xlu0 %1592
        %v1594 = vsel %vm647, %v1591, %v1593
        %v1595 = vsel %vm647, %v1593, %v1591
        %1596 = vrot.lane.b32.xlu0 %v1368, 1
        %v1597 = vpop.permute.xlu0 %1596
        %1598 = vrot.lane.b32.xlu0 %v1369, 1
        %v1599 = vpop.permute.xlu0 %1598
        %v1600 = vsel %vm647, %v1597, %v1599
        %v1601 = vsel %vm647, %v1599, %v1597
        %1602 = vrot.lane.b32.xlu0 %v1382, 1
        %v1603 = vpop.permute.xlu0 %1602
        %1604 = vrot.lane.b32.xlu0 %v1383, 1
        %v1605 = vpop.permute.xlu0 %1604
        %v1606 = vsel %vm647, %v1603, %v1605
        %v1607 = vsel %vm647, %v1605, %v1603
        %s1608 = scalar_lea.vmem %s3, 3
        %v1609 = vld [vmem:[%s1608] ss:$8 sm:$0x3]
        %v1611 = vlaneseq
        %v1612 = vshrl.u32 %v1611, 7
        %v1613 = vsub.s32 0, %v1612
        %v1614 = vrot.slane %v1609, %v1613
        %v1615 = vlaneseq
        %v1616 = vshrl.u32 %v1615, 7
        %v1617 = vsub.s32 1, %v1616
        %v1618 = vrot.slane %v1609, %v1617
        %v1621 = vmul.f32 %v1595, %v1614
        %v1622 = vmul.f32 %v1594, %v1618
        %s1623 = scalar_lea.vmem %s3, 20
        %v1624 = vld [vmem:[%s1623] ss:$8 sm:$0x3]
        %v1626 = vlaneseq
        %v1627 = vshrl.u32 %v1626, 7
        %v1628 = vsub.s32 0, %v1627
        %v1629 = vrot.slane %v1624, %v1628
        %v1630 = vlaneseq
        %v1631 = vshrl.u32 %v1630, 7
        %v1632 = vsub.s32 1, %v1631
        %v1633 = vrot.slane %v1624, %v1632
        %v1636 = vmul.f32 %v1601, %v1629
        %v1637 = vmul.f32 %v1600, %v1633
        %v1638 = vadd.f32 %v1621, %v1636
        %v1639 = vadd.f32 %v1622, %v1637
        %s1640 = scalar_lea.vmem %s3, 37
        %v1641 = vld [vmem:[%s1640] ss:$8 sm:$0x3]
        %v1643 = vlaneseq
        %v1644 = vshrl.u32 %v1643, 7
        %v1645 = vsub.s32 0, %v1644
        %v1646 = vrot.slane %v1641, %v1645
        %v1647 = vlaneseq
        %v1648 = vshrl.u32 %v1647, 7
        %v1649 = vsub.s32 1, %v1648
        %v1650 = vrot.slane %v1641, %v1649
        %v1653 = vmul.f32 %v1607, %v1646
        %v1654 = vmul.f32 %v1606, %v1650
        %v1655 = vadd.f32 %v1638, %v1653
        %v1656 = vadd.f32 %v1639, %v1654
        %v1657 = vadd.f32 %v1588, %v1655
        %v1658 = vadd.f32 %v1589, %v1656
        %s1659 = scalar_lea.vmem %s3, 4
        %v1660 = vld [vmem:[%s1659] ss:$8 sm:$0x3]
        %v1662 = vlaneseq
        %v1663 = vshrl.u32 %v1662, 7
        %v1664 = vsub.s32 0, %v1663
        %v1665 = vrot.slane %v1660, %v1664
        %v1666 = vlaneseq
        %v1667 = vshrl.u32 %v1666, 7
        %v1668 = vsub.s32 1, %v1667
        %v1669 = vrot.slane %v1660, %v1668
        %v1672 = vmul.f32 %v1376, %v1665
        %v1673 = vmul.f32 %v1377, %v1669
        %s1674 = scalar_lea.vmem %s3, 21
        %v1675 = vld [vmem:[%s1674] ss:$8 sm:$0x3]
        %v1677 = vlaneseq
        %v1678 = vshrl.u32 %v1677, 7
        %v1679 = vsub.s32 0, %v1678
        %v1680 = vrot.slane %v1675, %v1679
        %v1681 = vlaneseq
        %v1682 = vshrl.u32 %v1681, 7
        %v1683 = vsub.s32 1, %v1682
        %v1684 = vrot.slane %v1675, %v1683
        %v1687 = vmul.f32 %v1368, %v1680
        %v1688 = vmul.f32 %v1369, %v1684
        %v1689 = vadd.f32 %v1672, %v1687
        %v1690 = vadd.f32 %v1673, %v1688
        %s1691 = scalar_lea.vmem %s3, 38
        %v1692 = vld [vmem:[%s1691] ss:$8 sm:$0x3]
        %v1694 = vlaneseq
        %v1695 = vshrl.u32 %v1694, 7
        %v1696 = vsub.s32 0, %v1695
        %v1697 = vrot.slane %v1692, %v1696
        %v1698 = vlaneseq
        %v1699 = vshrl.u32 %v1698, 7
        %v1700 = vsub.s32 1, %v1699
        %v1701 = vrot.slane %v1692, %v1700
        %v1704 = vmul.f32 %v1382, %v1697
        %v1705 = vmul.f32 %v1383, %v1701
        %v1706 = vadd.f32 %v1689, %v1704
        %v1707 = vadd.f32 %v1690, %v1705
        %v1708 = vadd.f32 %v1657, %v1706
        %v1709 = vadd.f32 %v1658, %v1707
        %1710 = vrot.lane.b32.xlu0 %v1376, 127
        %v1711 = vpop.permute.xlu0 %1710
        %1712 = vrot.lane.b32.xlu0 %v1377, 127
        %v1713 = vpop.permute.xlu0 %1712
        %v1714 = vsel %vm874, %v1711, %v1713
        %v1715 = vsel %vm874, %v1713, %v1711
        %1716 = vrot.lane.b32.xlu0 %v1368, 127
        %v1717 = vpop.permute.xlu0 %1716
        %1718 = vrot.lane.b32.xlu0 %v1369, 127
        %v1719 = vpop.permute.xlu0 %1718
        %v1720 = vsel %vm874, %v1717, %v1719
        %v1721 = vsel %vm874, %v1719, %v1717
        %1722 = vrot.lane.b32.xlu0 %v1382, 127
        %v1723 = vpop.permute.xlu0 %1722
        %1724 = vrot.lane.b32.xlu0 %v1383, 127
        %v1725 = vpop.permute.xlu0 %1724
        %v1726 = vsel %vm874, %v1723, %v1725
        %v1727 = vsel %vm874, %v1725, %v1723
        %s1728 = scalar_lea.vmem %s3, 5
        %v1729 = vld [vmem:[%s1728] ss:$8 sm:$0x3]
        %v1731 = vlaneseq
        %v1732 = vshrl.u32 %v1731, 7
        %v1733 = vsub.s32 0, %v1732
        %v1734 = vrot.slane %v1729, %v1733
        %v1735 = vlaneseq
        %v1736 = vshrl.u32 %v1735, 7
        %v1737 = vsub.s32 1, %v1736
        %v1738 = vrot.slane %v1729, %v1737
        %v1741 = vmul.f32 %v1714, %v1734
        %v1742 = vmul.f32 %v1715, %v1738
        %s1743 = scalar_lea.vmem %s3, 22
        %v1744 = vld [vmem:[%s1743] ss:$8 sm:$0x3]
        %v1746 = vlaneseq
        %v1747 = vshrl.u32 %v1746, 7
        %v1748 = vsub.s32 0, %v1747
        %v1749 = vrot.slane %v1744, %v1748
        %v1750 = vlaneseq
        %v1751 = vshrl.u32 %v1750, 7
        %v1752 = vsub.s32 1, %v1751
        %v1753 = vrot.slane %v1744, %v1752
        %v1756 = vmul.f32 %v1720, %v1749
        %v1757 = vmul.f32 %v1721, %v1753
        %v1758 = vadd.f32 %v1741, %v1756
        %v1759 = vadd.f32 %v1742, %v1757
        %s1760 = scalar_lea.vmem %s3, 39
        %v1761 = vld [vmem:[%s1760] ss:$8 sm:$0x3]
        %v1763 = vlaneseq
        %v1764 = vshrl.u32 %v1763, 7
        %v1765 = vsub.s32 0, %v1764
        %v1766 = vrot.slane %v1761, %v1765
        %v1767 = vlaneseq
        %v1768 = vshrl.u32 %v1767, 7
        %v1769 = vsub.s32 1, %v1768
        %v1770 = vrot.slane %v1761, %v1769
        %v1773 = vmul.f32 %v1726, %v1766
        %v1774 = vmul.f32 %v1727, %v1770
        %v1775 = vadd.f32 %v1758, %v1773
        %v1776 = vadd.f32 %v1759, %v1774
        %v1777 = vadd.f32 %v1708, %v1775
        %v1778 = vadd.f32 %v1709, %v1776
        %1779 = vrot.lane.b32.xlu0 %v1376, 113
        %v1780 = vpop.permute.xlu0 %1779
        %1781 = vrot.lane.b32.xlu0 %v1377, 113
        %v1782 = vpop.permute.xlu0 %1781
        %v1783 = vsel %vm995, %v1780, %v1782
        %v1784 = vsel %vm995, %v1782, %v1780
        %1785 = vrot.lane.b32.xlu0 %v1368, 113
        %v1786 = vpop.permute.xlu0 %1785
        %1787 = vrot.lane.b32.xlu0 %v1369, 113
        %v1788 = vpop.permute.xlu0 %1787
        %v1789 = vsel %vm995, %v1786, %v1788
        %v1790 = vsel %vm995, %v1788, %v1786
        %1791 = vrot.lane.b32.xlu0 %v1382, 113
        %v1792 = vpop.permute.xlu0 %1791
        %1793 = vrot.lane.b32.xlu0 %v1383, 113
        %v1794 = vpop.permute.xlu0 %1793
        %v1795 = vsel %vm995, %v1792, %v1794
        %v1796 = vsel %vm995, %v1794, %v1792
        %s1797 = scalar_lea.vmem %s3, 6
        %v1798 = vld [vmem:[%s1797] ss:$8 sm:$0x3]
        %v1800 = vlaneseq
        %v1801 = vshrl.u32 %v1800, 7
        %v1802 = vsub.s32 0, %v1801
        %v1803 = vrot.slane %v1798, %v1802
        %v1804 = vlaneseq
        %v1805 = vshrl.u32 %v1804, 7
        %v1806 = vsub.s32 1, %v1805
        %v1807 = vrot.slane %v1798, %v1806
        %v1810 = vmul.f32 %v1783, %v1803
        %v1811 = vmul.f32 %v1784, %v1807
        %s1812 = scalar_lea.vmem %s3, 23
        %v1813 = vld [vmem:[%s1812] ss:$8 sm:$0x3]
        %v1815 = vlaneseq
        %v1816 = vshrl.u32 %v1815, 7
        %v1817 = vsub.s32 0, %v1816
        %v1818 = vrot.slane %v1813, %v1817
        %v1819 = vlaneseq
        %v1820 = vshrl.u32 %v1819, 7
        %v1821 = vsub.s32 1, %v1820
        %v1822 = vrot.slane %v1813, %v1821
        %v1825 = vmul.f32 %v1789, %v1818
        %v1826 = vmul.f32 %v1790, %v1822
        %v1827 = vadd.f32 %v1810, %v1825
        %v1828 = vadd.f32 %v1811, %v1826
        %s1829 = scalar_lea.vmem %s3, 48
        %v1830 = vld [vmem:[%s1829] ss:$8 sm:$0x3]
        %v1832 = vlaneseq
        %v1833 = vshrl.u32 %v1832, 7
        %v1834 = vsub.s32 0, %v1833
        %v1835 = vrot.slane %v1830, %v1834
        %v1836 = vlaneseq
        %v1837 = vshrl.u32 %v1836, 7
        %v1838 = vsub.s32 1, %v1837
        %v1839 = vrot.slane %v1830, %v1838
        %v1842 = vmul.f32 %v1795, %v1835
        %v1843 = vmul.f32 %v1796, %v1839
        %v1844 = vadd.f32 %v1827, %v1842
        %v1845 = vadd.f32 %v1828, %v1843
        %v1846 = vadd.f32 %v1777, %v1844
        %v1847 = vadd.f32 %v1778, %v1845
        %1848 = vrot.lane.b32.xlu0 %v1376, 112
        %v1849 = vpop.permute.xlu0 %1848
        %1850 = vrot.lane.b32.xlu0 %v1377, 112
        %v1851 = vpop.permute.xlu0 %1850
        %v1852 = vsel %vm1116, %v1849, %v1851
        %v1853 = vsel %vm1116, %v1851, %v1849
        %1854 = vrot.lane.b32.xlu0 %v1368, 112
        %v1855 = vpop.permute.xlu0 %1854
        %1856 = vrot.lane.b32.xlu0 %v1369, 112
        %v1857 = vpop.permute.xlu0 %1856
        %v1858 = vsel %vm1116, %v1855, %v1857
        %v1859 = vsel %vm1116, %v1857, %v1855
        %1860 = vrot.lane.b32.xlu0 %v1382, 112
        %v1861 = vpop.permute.xlu0 %1860
        %1862 = vrot.lane.b32.xlu0 %v1383, 112
        %v1863 = vpop.permute.xlu0 %1862
        %v1864 = vsel %vm1116, %v1861, %v1863
        %v1865 = vsel %vm1116, %v1863, %v1861
        %s1866 = scalar_lea.vmem %s3, 7
        %v1867 = vld [vmem:[%s1866] ss:$8 sm:$0x3]
        %v1869 = vlaneseq
        %v1870 = vshrl.u32 %v1869, 7
        %v1871 = vsub.s32 0, %v1870
        %v1872 = vrot.slane %v1867, %v1871
        %v1873 = vlaneseq
        %v1874 = vshrl.u32 %v1873, 7
        %v1875 = vsub.s32 1, %v1874
        %v1876 = vrot.slane %v1867, %v1875
        %v1879 = vmul.f32 %v1852, %v1872
        %v1880 = vmul.f32 %v1853, %v1876
        %s1881 = scalar_lea.vmem %s3, 32
        %v1882 = vld [vmem:[%s1881] ss:$8 sm:$0x3]
        %v1884 = vlaneseq
        %v1885 = vshrl.u32 %v1884, 7
        %v1886 = vsub.s32 0, %v1885
        %v1887 = vrot.slane %v1882, %v1886
        %v1888 = vlaneseq
        %v1889 = vshrl.u32 %v1888, 7
        %v1890 = vsub.s32 1, %v1889
        %v1891 = vrot.slane %v1882, %v1890
        %v1894 = vmul.f32 %v1858, %v1887
        %v1895 = vmul.f32 %v1859, %v1891
        %v1896 = vadd.f32 %v1879, %v1894
        %v1897 = vadd.f32 %v1880, %v1895
        %s1898 = scalar_lea.vmem %s3, 49
        %v1899 = vld [vmem:[%s1898] ss:$8 sm:$0x3]
        %v1901 = vlaneseq
        %v1902 = vshrl.u32 %v1901, 7
        %v1903 = vsub.s32 0, %v1902
        %v1904 = vrot.slane %v1899, %v1903
        %v1905 = vlaneseq
        %v1906 = vshrl.u32 %v1905, 7
        %v1907 = vsub.s32 1, %v1906
        %v1908 = vrot.slane %v1899, %v1907
        %v1911 = vmul.f32 %v1864, %v1904
        %v1912 = vmul.f32 %v1865, %v1908
        %v1913 = vadd.f32 %v1896, %v1911
        %v1914 = vadd.f32 %v1897, %v1912
        %v1915 = vadd.f32 %v1846, %v1913
        %v1916 = vadd.f32 %v1847, %v1914
        %1917 = vrot.lane.b32.xlu0 %v1376, 111
        %v1918 = vpop.permute.xlu0 %1917
        %1919 = vrot.lane.b32.xlu0 %v1377, 111
        %v1920 = vpop.permute.xlu0 %1919
        %v1921 = vsel %vm1237, %v1918, %v1920
        %v1922 = vsel %vm1237, %v1920, %v1918
        %1923 = vrot.lane.b32.xlu0 %v1368, 111
        %v1924 = vpop.permute.xlu0 %1923
        %1925 = vrot.lane.b32.xlu0 %v1369, 111
        %v1926 = vpop.permute.xlu0 %1925
        %v1927 = vsel %vm1237, %v1924, %v1926
        %v1928 = vsel %vm1237, %v1926, %v1924
        %1929 = vrot.lane.b32.xlu0 %v1382, 111
        %v1930 = vpop.permute.xlu0 %1929
        %1931 = vrot.lane.b32.xlu0 %v1383, 111
        %v1932 = vpop.permute.xlu0 %1931
        %v1933 = vsel %vm1237, %v1930, %v1932
        %v1934 = vsel %vm1237, %v1932, %v1930
        %s1935 = scalar_lea.vmem %s3, 16
        %v1936 = vld [vmem:[%s1935] ss:$8 sm:$0x3]
        %v1938 = vlaneseq
        %v1939 = vshrl.u32 %v1938, 7
        %v1940 = vsub.s32 0, %v1939
        %v1941 = vrot.slane %v1936, %v1940
        %v1942 = vlaneseq
        %v1943 = vshrl.u32 %v1942, 7
        %v1944 = vsub.s32 1, %v1943
        %v1945 = vrot.slane %v1936, %v1944
        %v1948 = vmul.f32 %v1921, %v1941
        %v1949 = vmul.f32 %v1922, %v1945
        %s1950 = scalar_lea.vmem %s3, 33
        %v1951 = vld [vmem:[%s1950] ss:$8 sm:$0x3]
        %v1953 = vlaneseq
        %v1954 = vshrl.u32 %v1953, 7
        %v1955 = vsub.s32 0, %v1954
        %v1956 = vrot.slane %v1951, %v1955
        %v1957 = vlaneseq
        %v1958 = vshrl.u32 %v1957, 7
        %v1959 = vsub.s32 1, %v1958
        %v1960 = vrot.slane %v1951, %v1959
        %v1963 = vmul.f32 %v1927, %v1956
        %v1964 = vmul.f32 %v1928, %v1960
        %v1965 = vadd.f32 %v1948, %v1963
        %v1966 = vadd.f32 %v1949, %v1964
        %s1967 = scalar_lea.vmem %s3, 50
        %v1968 = vld [vmem:[%s1967] ss:$8 sm:$0x3]
        %v1970 = vlaneseq
        %v1971 = vshrl.u32 %v1970, 7
        %v1972 = vsub.s32 0, %v1971
        %v1973 = vrot.slane %v1968, %v1972
        %v1974 = vlaneseq
        %v1975 = vshrl.u32 %v1974, 7
        %v1976 = vsub.s32 1, %v1975
        %v1977 = vrot.slane %v1968, %v1976
        %v1980 = vmul.f32 %v1933, %v1973
        %v1981 = vmul.f32 %v1934, %v1977
        %v1982 = vadd.f32 %v1965, %v1980
        %v1983 = vadd.f32 %v1966, %v1981
        %v1984 = vadd.f32 %v1915, %v1982
        %v1985 = vadd.f32 %v1916, %v1983
        %s1986 = scalar_lea.vmem %s4, 1
        %v1987 = vld [vmem:[%s1986] ss:$2 sm:$0x3]
        %v1989 = vlaneseq
        %v1990 = vshrl.u32 %v1989, 7
        %v1991 = vsub.s32 0, %v1990
        %v1992 = vrot.slane %v1987, %v1991
        %v1993 = vlaneseq
        %v1994 = vshrl.u32 %v1993, 7
        %v1995 = vsub.s32 1, %v1994
        %v1996 = vrot.slane %v1987, %v1995
        %v1999 = vadd.f32 %v1984, %v1992
        %v2000 = vadd.f32 %v1985, %v1996
        %v2001 = vmax.f32 %v1999, 0.0
        %v2002 = vmax.f32 %v2000, 0.0
        %s2003 = sld [smem:[#allocation2]]
        %v2004 = vstv %s2003
        %v2005 = vmul.f32 %v2004, %v266
        %s2006 = sld [smem:[#allocation2 + $0x1]]
        %v2007 = vstv %s2006
        %v2008 = vmul.f32 %v2007, %v1368
        %v2009 = vmul.f32 %v2007, %v1369
        %v2012 = vcombine.low %v2008, %v2009
        %v2014 = vadd.f32 %v2005, %v2012
        %s2015 = sld [smem:[#allocation2 + $0x2]]
        %v2016 = vstv %s2015
        %v2017 = vmul.f32 %v2016, %v2001
        %v2018 = vmul.f32 %v2016, %v2002
        %v2021 = vcombine.low %v2017, %v2018
        %v2023 = vadd.f32 %v2014, %v2021
        %s2024 = sld [smem:[#allocation2 + $0x3]]
        %v2025 = vstv %s2024
        %v2026 = vadd.f32 %v2023, %v2025
        %2027 = vst [vmem:[%s265] sm:$0xff] %v2026
        %p2028 = scmp.lt.s32.totalorder %s18, 1
        %s2029 = scalar_select %p2028, %s18, 1
        %s2030 = smul.addr %s2029, 2
        %s2031 = smul.addr %s2030, 4
        %s2032 = scalar_lea.vmem %s6, %s2031
        // Predicated region
        $region49: #{scrb_forward.1} parent=43 // pred_check
          %p2033 = pneg %p167
        $region50: #{scrb_forward.1} parent=43 // pred_check_branch
          %2035 = sbr.rel (%p2033) target = $region52
        $region51: #{scrb_forward.1} parent=43 // pred_region
          _
        $region52: #{scrb_forward.1} parent=43 // pred_fallthru
          _
      $region44: #{scrb_forward.1} parent=5 // pred_fallthru
        _
      %p2036 = scmp.le.s32.totalorder 2, %s13
      // Predicated region
      $region53: #{scrb_forward.1} parent=5 // pred_check
        %p2037 = pneg %p2036
      $region54: #{scrb_forward.1} parent=5 // pred_check_branch
        %2039 = sbr.rel (%p2037) target = $region56
      $region55: #{scrb_forward.1} parent=5 // pred_region
        %s2040 = ssub.s32 %s13, 2
        // Predicated region
        $region57: #{scrb_forward.1} parent=55 // pred_check
          %p2041 = pneg %p173
        $region58: #{scrb_forward.1} parent=55 // pred_check_branch
          %2043 = sbr.rel (%p2041) target = $region60
        $region59: #{scrb_forward.1} parent=55 // pred_region
          %p2044 = scmp.lt.s32.totalorder %s19, 1
          %s2045 = scalar_select %p2044, %s19, 1
          %s2046 = smul.addr %s2045, 2
          %s2047 = smul.addr %s2046, 4
          %s2048 = scalar_lea.vmem %s6, %s2047
        $region60: #{scrb_forward.1} parent=55 // pred_fallthru
          _
      $region56: #{scrb_forward.1} parent=5 // pred_fallthru
        _
    $region6: #{scrb_forward.1} parent=1 // loop_footer
      %s17 = sadd.s32 1, %s13
    $region7: #{scrb_forward.1} parent=1 // loop_footer_branch
      %12 = sbr.rel target = $region3
    $region8: #{scrb_forward.1} parent=1 // loop_exit
      _
    %2049 = vsyncpa [#allocation3], 1
    %s2050 = scalar_lea.sflag [#allocation3], 1
    %2051 = vsyncpa %s2050, 1

</llo_original>
